<compile_context>
chip_gen: v6e
topology: v6e:2x2x1
jax: 0.10.0
libtpu: 0.0.40
codegen_flags: <defaults>
</compile_context>

<pallas_src>
import jax
import jax.numpy as jnp
from jax import lax
from jax.experimental import pallas as pl
from jax.experimental.pallas import tpu as pltpu


# ----------------------------- Pallas kernels -----------------------------

def _conv_relu_pool_kernel(p_ref, w_ref, b_ref, o_ref):
    """Fused conv (as matmul over im2col patches) + 2x2 maxpool + bias + relu.

    p_ref : (4, F, N)  one patch matrix per 2x2 pool-window position,
            F = C_in*kh*kw, N = B * pooled_H * pooled_W (batch folded into
            the lane/column dimension).
    w_ref : (C_out, F).   b_ref : (C_out, 1).   o_ref : (C_out, N).
    """
    w = w_ref[...]
    d = jnp.dot(w, p_ref[0], preferred_element_type=jnp.float32)
    for k in range(1, 4):                      # static unroll: 4 pool positions
        d = jnp.maximum(d, jnp.dot(w, p_ref[k],
                                   preferred_element_type=jnp.float32))
    # bias + relu hoisted out of the 4-way max (exactly equivalent).
    o_ref[...] = jnp.maximum(d + b_ref[...], 0.0)


def _conv_pool_fc_kernel(p_ref, w2_ref, b2_ref, w3_ref, b3_ref, o_ref):
    """conv2 + 2x2 maxpool + bias + relu, fused with fc3 + sigmoid.

    p_ref : (4, F2, B*S)   stacked pool-position patch matrices (cols = (b,s))
    w2_ref: (OC, F2)       b2_ref: (OC, 1)
    w3_ref: (NO, OC, S)    fc3 weight reshaped to (out, channel, spatial)
    b3_ref: (1, NO)
    o_ref : (B, NO)        final sigmoid(fc3(...)) logits
    """
    B = o_ref.shape[0]
    S = w3_ref.shape[2]

    w2 = w2_ref[...]
    d = jnp.dot(w2, p_ref[0], preferred_element_type=jnp.float32)
    for k in range(1, 4):
        d = jnp.maximum(d, jnp.dot(w2, p_ref[k],
                                   preferred_element_type=jnp.float32))
    a2 = jnp.maximum(d + b2_ref[...], 0.0)     # (OC, B*S), cols ordered (b, s)

    # Fused fc3 + sigmoid: out[b, o] = sum_{c,s} W3[o,c,s] * a2[c, b*S+s].
    # Tiny (10*16*16 per batch item) -> cheap VPU multiply + lane reductions;
    # avoids any in-kernel reshape/transpose of the activation.
    w3 = w3_ref[...]                           # (NO, OC, S)
    rows = []
    for b in range(B):                         # static unroll (small B)
        a2_b = a2[:, b * S:(b + 1) * S]        # (OC, S) static slice
        t = (w3 * a2_b[None, :, :]).sum(axis=2).sum(axis=1)   # (NO,)
        rows.append(t)
    logits = jnp.stack(rows, axis=0) + b3_ref[...]            # (B, NO)
    o_ref[...] = jax.nn.sigmoid(logits)


# ------------------------------- wrappers ---------------------------------

def _patches(x_nchw, kh, kw):
    """im2col patches: (B, C, H, W) -> (B, C*kh*kw, Ho, Wo) in one XLA op."""
    return lax.conv_general_dilated_patches(
        x_nchw, (kh, kw), (1, 1), "VALID", precision=lax.Precision.HIGHEST)


def _weight_matrix(w_oihw):
    """(OC, IC, kh, kw) -> (OC, IC*kh*kw), same feature order as _patches."""
    oc, ic, kh, kw = w_oihw.shape
    return _patches(w_oihw, kh, kw).reshape(oc, ic * kh * kw)


def _pool_patches(x_nchw, kh, kw):
    """(B, C, H, W) -> stacked (4, F, B*S) patch matrices, one per 2x2
    pool-window position, batch folded into the columns (lane dim)."""
    B, C, H, W = x_nchw.shape
    F = C * kh * kw
    Ho, Wo = H - kh + 1, W - kw + 1
    Hp, Wp = Ho // 2, Wo // 2
    S = Hp * Wp
    pat = _patches(x_nchw, kh, kw)                            # (B, F, Ho, Wo)
    pw = [pat[:, :, wy::2, wx::2].transpose(1, 0, 2, 3).reshape(F, B * S)
          for wy in (0, 1) for wx in (0, 1)]
    return jnp.stack(pw, axis=0), Hp, Wp                      # (4, F, B*S)


def conv_relu_pool(x_nchw, w_mat, b_col, kh, kw):
    """Conv(kxk, VALID) + bias + relu + 2x2/stride-2 maxpool, one kernel."""
    B = x_nchw.shape[0]
    OC, F = w_mat.shape
    p, Hp, Wp = _pool_patches(x_nchw, kh, kw)
    N = B * Hp * Wp

    out = pl.pallas_call(
        _conv_relu_pool_kernel,
        out_shape=jax.ShapeDtypeStruct((OC, N), jnp.float32),
        grid=(1,),
        in_specs=[pl.BlockSpec((4, F, N), lambda i: (0, 0, 0)),
                  pl.BlockSpec((OC, F), lambda i: (0, 0)),
                  pl.BlockSpec((OC, 1), lambda i: (0, 0))],
        out_specs=pl.BlockSpec((OC, N), lambda i: (0, 0)),
        compiler_params=pltpu.CompilerParams(
            dimension_semantics=("arbitrary",)),
    )(p, w_mat, b_col)
    # columns ordered (b, y, x) -> back to NCHW for the next stage's im2col.
    return out.reshape(OC, B, Hp, Wp).transpose(1, 0, 2, 3)


def conv_pool_fc_sigmoid(x_nchw, w2_mat, b2_col, w3_r, b3_row, kh, kw):
    """conv2 + bias + relu + pool + fc3 + sigmoid in a single kernel."""
    B = x_nchw.shape[0]
    OC, F = w2_mat.shape
    NO, _, S_w3 = w3_r.shape
    p, Hp, Wp = _pool_patches(x_nchw, kh, kw)
    S = Hp * Wp
    assert S == S_w3
    N = B * S

    return pl.pallas_call(
        _conv_pool_fc_kernel,
        out_shape=jax.ShapeDtypeStruct((B, NO), jnp.float32),
        grid=(1,),
        in_specs=[pl.BlockSpec((4, F, N), lambda i: (0, 0, 0)),
                  pl.BlockSpec((OC, F), lambda i: (0, 0)),
                  pl.BlockSpec((OC, 1), lambda i: (0, 0)),
                  pl.BlockSpec((NO, OC, S), lambda i: (0, 0, 0)),
                  pl.BlockSpec((1, NO), lambda i: (0, 0))],
        out_specs=pl.BlockSpec((B, NO), lambda i: (0, 0)),
        compiler_params=pltpu.CompilerParams(
            dimension_semantics=("arbitrary",)),
    )(p, w2_mat, b2_col, w3_r, b3_row)


def prepare_params(params):
    """One-time weight prep (hoisted out of the per-forward path)."""
    w1, b1, w2, b2, w3, b3 = params
    oc2 = w2.shape[0]                       # 16
    s2 = w3.shape[1] // oc2                 # 16 = 4*4 pooled spatial
    return (_weight_matrix(w1), b1.reshape(-1, 1),
            _weight_matrix(w2), b2.reshape(-1, 1),
            w3.reshape(w3.shape[0], oc2, s2),   # (10, 16, 16): (o, c, y*4+x)
            b3.reshape(1, -1))


@jax.jit
def lenet_forward(x, prep):
    w1m, b1c, w2m, b2c, w3r, b3r = prep
    y = conv_relu_pool(x, w1m, b1c, 5, 5)                    # (B, 6, 12, 12)
    return conv_pool_fc_sigmoid(y, w2m, b2c, w3r, b3r, 5, 5)  # (B, 10)


# --------------------------- pure-JAX reference ----------------------------

def _ref_maxpool(x):
    B, C, H, W = x.shape
    return x.reshape(B, C, H // 2, 2, W // 2, 2).max(axis=(3, 5))


def lenet_reference(x, params):
    w1, b1, w2, b2, w3, b3 = params
    dn = ("NCHW", "OIHW", "NCHW")
    y = lax.conv_general_dilated(x, w1, (1, 1), "VALID", dimension_numbers=dn)
    y = jnp.maximum(y + b1[None, :, None, None], 0.0)
    y = _ref_maxpool(y)
    y = lax.conv_general_dilated(y, w2, (1, 1), "VALID", dimension_numbers=dn)
    y = jnp.maximum(y + b2[None, :, None, None], 0.0)
    y = _ref_maxpool(y)
    y = y.reshape(y.shape[0], -1)
    return jax.nn.sigmoid(y @ w3.T + b3)


# ---------------------------------- main -----------------------------------

if __name__ == "__main__":
    key = jax.random.PRNGKey(0)
    ks = jax.random.split(key, 7)
    # Deterministic synthetic parameters (shapes from LeNet.__init__).
    # fc4 / fc5 exist in __init__ but are unused in forward(), so omitted.
    w1 = 0.1 * jax.random.normal(ks[0], (6, 1, 5, 5), jnp.float32)
    b1 = 0.1 * jax.random.normal(ks[1], (6,), jnp.float32)
    w2 = 0.1 * jax.random.normal(ks[2], (16, 6, 5, 5), jnp.float32)
    b2 = 0.1 * jax.random.normal(ks[3], (16,), jnp.float32)
    w3 = 0.1 * jax.random.normal(ks[4], (10, 256), jnp.float32)
    b3 = 0.1 * jax.random.normal(ks[5], (10,), jnp.float32)
    params = (w1, b1, w2, b2, w3, b3)

    # Input consistent with fc3 = Linear(16*4*4, 10): 28x28 single-channel.
    x = jax.random.normal(ks[6], (2, 1, 28, 28), jnp.float32)

    prep = prepare_params(params)                         # hoisted, done once
    out = jax.block_until_ready(lenet_forward(x, prep))
    ref = jax.block_until_ready(lenet_reference(x, params))
    assert out.shape == (2, 10)
    assert jnp.allclose(out, ref, atol=1e-5, rtol=1e-4)
    print("KERNEL_OK")
</pallas_src>

<mosaic_0001>
module attributes {stable_mosaic.version = 11 : i64} {
  func.func @_conv_relu_pool_kernel(%arg0: i32, %arg1: memref<4x25x288xf32, #tpu.memory_space<vmem>>, %arg2: memref<6x25xf32, #tpu.memory_space<vmem>>, %arg3: memref<6x1xf32, #tpu.memory_space<vmem>>, %arg4: memref<6x288xf32, #tpu.memory_space<vmem>>) attributes {dimension_semantics = [#tpu.dimension_semantics<arbitrary>], iteration_bounds = array<i64: 1>, scalar_prefetch = 0 : i64, scratch_operands = 0 : i64, tpu.core_type = #tpu.core_type<tc>, window_params = [{pipeline_mode = #tpu.pipeline_mode<synchronous>, transform_indices = @transform_0, window_bounds = array<i64: 4, 25, 288>}, {pipeline_mode = #tpu.pipeline_mode<synchronous>, transform_indices = @transform_1, window_bounds = array<i64: 6, 25>}, {pipeline_mode = #tpu.pipeline_mode<synchronous>, transform_indices = @transform_2, window_bounds = array<i64: 6, 1>}, {pipeline_mode = #tpu.pipeline_mode<synchronous>, transform_indices = @transform_3, window_bounds = array<i64: 6, 288>}]} {
    %c0 = arith.constant 0 : index
    %c0_0 = arith.constant 0 : index
    %0 = vector.load %arg2[%c0, %c0_0] : memref<6x25xf32, #tpu.memory_space<vmem>>, vector<6x25xf32>
    %c0_1 = arith.constant 0 : index
    %c0_2 = arith.constant 0 : index
    %c0_3 = arith.constant 0 : index
    %1 = vector.load %arg1[%c0_1, %c0_2, %c0_3] : memref<4x25x288xf32, #tpu.memory_space<vmem>>, vector<1x25x288xf32>
    %2 = vector.shape_cast %1 : vector<1x25x288xf32> to vector<25x288xf32>
    %cst = arith.constant dense<0.000000e+00> : vector<6x288xf32>
    %3 = tpu.matmul %0, %2, %cst {dimension_numbers = #tpu.dot_dimension_numbers<[1], [0], [0], [1], [0, 0, 1, 1], [], []>} : vector<6x25xf32>, vector<25x288xf32>, vector<6x288xf32> -> vector<6x288xf32>
    %c1 = arith.constant 1 : index
    %c0_4 = arith.constant 0 : index
    %c0_5 = arith.constant 0 : index
    %4 = vector.load %arg1[%c1, %c0_4, %c0_5] : memref<4x25x288xf32, #tpu.memory_space<vmem>>, vector<1x25x288xf32>
    %5 = vector.shape_cast %4 : vector<1x25x288xf32> to vector<25x288xf32>
    %cst_6 = arith.constant dense<0.000000e+00> : vector<6x288xf32>
    %6 = tpu.matmul %0, %5, %cst_6 {dimension_numbers = #tpu.dot_dimension_numbers<[1], [0], [0], [1], [0, 0, 1, 1], [], []>} : vector<6x25xf32>, vector<25x288xf32>, vector<6x288xf32> -> vector<6x288xf32>
    %7 = arith.maximumf %3, %6 : vector<6x288xf32>
    %c2 = arith.constant 2 : index
    %c0_7 = arith.constant 0 : index
    %c0_8 = arith.constant 0 : index
    %8 = vector.load %arg1[%c2, %c0_7, %c0_8] : memref<4x25x288xf32, #tpu.memory_space<vmem>>, vector<1x25x288xf32>
    %9 = vector.shape_cast %8 : vector<1x25x288xf32> to vector<25x288xf32>
    %cst_9 = arith.constant dense<0.000000e+00> : vector<6x288xf32>
    %10 = tpu.matmul %0, %9, %cst_9 {dimension_numbers = #tpu.dot_dimension_numbers<[1], [0], [0], [1], [0, 0, 1, 1], [], []>} : vector<6x25xf32>, vector<25x288xf32>, vector<6x288xf32> -> vector<6x288xf32>
    %11 = arith.maximumf %7, %10 : vector<6x288xf32>
    %c3 = arith.constant 3 : index
    %c0_10 = arith.constant 0 : index
    %c0_11 = arith.constant 0 : index
    %12 = vector.load %arg1[%c3, %c0_10, %c0_11] : memref<4x25x288xf32, #tpu.memory_space<vmem>>, vector<1x25x288xf32>
    %13 = vector.shape_cast %12 : vector<1x25x288xf32> to vector<25x288xf32>
    %cst_12 = arith.constant dense<0.000000e+00> : vector<6x288xf32>
    %14 = tpu.matmul %0, %13, %cst_12 {dimension_numbers = #tpu.dot_dimension_numbers<[1], [0], [0], [1], [0, 0, 1, 1], [], []>} : vector<6x25xf32>, vector<25x288xf32>, vector<6x288xf32> -> vector<6x288xf32>
    %15 = arith.maximumf %11, %14 : vector<6x288xf32>
    %c0_13 = arith.constant 0 : index
    %c0_14 = arith.constant 0 : index
    %16 = vector.load %arg3[%c0_13, %c0_14] : memref<6x1xf32, #tpu.memory_space<vmem>>, vector<6x1xf32>
    %17 = vector.broadcast %16 : vector<6x1xf32> to vector<6x288xf32>
    %18 = arith.addf %15, %17 : vector<6x288xf32>
    %cst_15 = arith.constant 0.000000e+00 : f32
    %19 = vector.broadcast %cst_15 : f32 to vector<6x288xf32>
    %20 = arith.maximumf %18, %19 : vector<6x288xf32>
    %c0_16 = arith.constant 0 : index
    %c0_17 = arith.constant 0 : index
    %21 = vector.load %arg4[%c0_16, %c0_17] : memref<6x288xf32, #tpu.memory_space<vmem>>, vector<6x288xf32>
    tpu.vector_store %arg4[%c0_16, %c0_17], %20 {strides = array<i32>} : memref<6x288xf32, #tpu.memory_space<vmem>>, vector<6x288xf32>,
    return
  }
  func.func @transform_0(%arg0: i32) -> (i32, i32, i32) {
    %c0_i32 = arith.constant 0 : i32
    %c0_i32_0 = arith.constant 0 : i32
    %c0_i32_1 = arith.constant 0 : i32
    %c0_i32_2 = arith.constant 0 : i32
    return %c0_i32, %c0_i32_0, %c0_i32_1 : i32, i32, i32
  }
  func.func @transform_1(%arg0: i32) -> (i32, i32) {
    %c0_i32 = arith.constant 0 : i32
    %c0_i32_0 = arith.constant 0 : i32
    %c0_i32_1 = arith.constant 0 : i32
    return %c0_i32, %c0_i32_0 : i32, i32
  }
  func.func @transform_2(%arg0: i32) -> (i32, i32) {
    %c0_i32 = arith.constant 0 : i32
    %c0_i32_0 = arith.constant 0 : i32
    %c0_i32_1 = arith.constant 0 : i32
    return %c0_i32, %c0_i32_0 : i32, i32
  }
  func.func @transform_3(%arg0: i32) -> (i32, i32) {
    %c0_i32 = arith.constant 0 : i32
    %c0_i32_0 = arith.constant 0 : i32
    %c0_i32_1 = arith.constant 0 : i32
    return %c0_i32, %c0_i32_0 : i32, i32
  }
}

module attributes {stable_mosaic.version = 11 : i64} {
  func.func @_conv_pool_fc_kernel(%arg0: i32, %arg1: memref<4x150x32xf32, #tpu.memory_space<vmem>>, %arg2: memref<16x150xf32, #tpu.memory_space<vmem>>, %arg3: memref<16x1xf32, #tpu.memory_space<vmem>>, %arg4: memref<10x16x16xf32, #tpu.memory_space<vmem>>, %arg5: memref<1x10xf32, #tpu.memory_space<vmem>>, %arg6: memref<2x10xf32, #tpu.memory_space<vmem>>) attributes {dimension_semantics = [#tpu.dimension_semantics<arbitrary>], iteration_bounds = array<i64: 1>, scalar_prefetch = 0 : i64, scratch_operands = 0 : i64, tpu.core_type = #tpu.core_type<tc>, window_params = [{pipeline_mode = #tpu.pipeline_mode<synchronous>, transform_indices = @transform_0, window_bounds = array<i64: 4, 150, 32>}, {pipeline_mode = #tpu.pipeline_mode<synchronous>, transform_indices = @transform_1, window_bounds = array<i64: 16, 150>}, {pipeline_mode = #tpu.pipeline_mode<synchronous>, transform_indices = @transform_2, window_bounds = array<i64: 16, 1>}, {pipeline_mode = #tpu.pipeline_mode<synchronous>, transform_indices = @transform_3, window_bounds = array<i64: 10, 16, 16>}, {pipeline_mode = #tpu.pipeline_mode<synchronous>, transform_indices = @transform_4, window_bounds = array<i64: 1, 10>}, {pipeline_mode = #tpu.pipeline_mode<synchronous>, transform_indices = @transform_5, window_bounds = array<i64: 2, 10>}]} {
    %c0 = arith.constant 0 : index
    %c0_0 = arith.constant 0 : index
    %0 = vector.load %arg2[%c0, %c0_0] : memref<16x150xf32, #tpu.memory_space<vmem>>, vector<16x150xf32>
    %c0_1 = arith.constant 0 : index
    %c0_2 = arith.constant 0 : index
    %c0_3 = arith.constant 0 : index
    %1 = vector.load %arg1[%c0_1, %c0_2, %c0_3] : memref<4x150x32xf32, #tpu.memory_space<vmem>>, vector<1x150x32xf32>
    %2 = vector.shape_cast %1 : vector<1x150x32xf32> to vector<150x32xf32>
    %cst = arith.constant dense<0.000000e+00> : vector<16x32xf32>
    %3 = tpu.matmul %0, %2, %cst {dimension_numbers = #tpu.dot_dimension_numbers<[1], [0], [0], [1], [0, 0, 1, 1], [], []>} : vector<16x150xf32>, vector<150x32xf32>, vector<16x32xf32> -> vector<16x32xf32>
    %c1 = arith.constant 1 : index
    %c0_4 = arith.constant 0 : index
    %c0_5 = arith.constant 0 : index
    %4 = vector.load %arg1[%c1, %c0_4, %c0_5] : memref<4x150x32xf32, #tpu.memory_space<vmem>>, vector<1x150x32xf32>
    %5 = vector.shape_cast %4 : vector<1x150x32xf32> to vector<150x32xf32>
    %cst_6 = arith.constant dense<0.000000e+00> : vector<16x32xf32>
    %6 = tpu.matmul %0, %5, %cst_6 {dimension_numbers = #tpu.dot_dimension_numbers<[1], [0], [0], [1], [0, 0, 1, 1], [], []>} : vector<16x150xf32>, vector<150x32xf32>, vector<16x32xf32> -> vector<16x32xf32>
    %7 = arith.maximumf %3, %6 : vector<16x32xf32>
    %c2 = arith.constant 2 : index
    %c0_7 = arith.constant 0 : index
    %c0_8 = arith.constant 0 : index
    %8 = vector.load %arg1[%c2, %c0_7, %c0_8] : memref<4x150x32xf32, #tpu.memory_space<vmem>>, vector<1x150x32xf32>
    %9 = vector.shape_cast %8 : vector<1x150x32xf32> to vector<150x32xf32>
    %cst_9 = arith.constant dense<0.000000e+00> : vector<16x32xf32>
    %10 = tpu.matmul %0, %9, %cst_9 {dimension_numbers = #tpu.dot_dimension_numbers<[1], [0], [0], [1], [0, 0, 1, 1], [], []>} : vector<16x150xf32>, vector<150x32xf32>, vector<16x32xf32> -> vector<16x32xf32>
    %11 = arith.maximumf %7, %10 : vector<16x32xf32>
    %c3 = arith.constant 3 : index
    %c0_10 = arith.constant 0 : index
    %c0_11 = arith.constant 0 : index
    %12 = vector.load %arg1[%c3, %c0_10, %c0_11] : memref<4x150x32xf32, #tpu.memory_space<vmem>>, vector<1x150x32xf32>
    %13 = vector.shape_cast %12 : vector<1x150x32xf32> to vector<150x32xf32>
    %cst_12 = arith.constant dense<0.000000e+00> : vector<16x32xf32>
    %14 = tpu.matmul %0, %13, %cst_12 {dimension_numbers = #tpu.dot_dimension_numbers<[1], [0], [0], [1], [0, 0, 1, 1], [], []>} : vector<16x150xf32>, vector<150x32xf32>, vector<16x32xf32> -> vector<16x32xf32>
    %15 = arith.maximumf %11, %14 : vector<16x32xf32>
    %c0_13 = arith.constant 0 : index
    %c0_14 = arith.constant 0 : index
    %16 = vector.load %arg3[%c0_13, %c0_14] : memref<16x1xf32, #tpu.memory_space<vmem>>, vector<16x1xf32>
    %17 = vector.broadcast %16 : vector<16x1xf32> to vector<16x32xf32>
    %18 = arith.addf %15, %17 : vector<16x32xf32>
    %cst_15 = arith.constant 0.000000e+00 : f32
    %19 = vector.broadcast %cst_15 : f32 to vector<16x32xf32>
    %20 = arith.maximumf %18, %19 : vector<16x32xf32>
    %c0_16 = arith.constant 0 : index
    %c0_17 = arith.constant 0 : index
    %c0_18 = arith.constant 0 : index
    %21 = vector.load %arg4[%c0_16, %c0_17, %c0_18] : memref<10x16x16xf32, #tpu.memory_space<vmem>>, vector<10x16x16xf32>
    %22 = vector.extract_strided_slice %20 {offsets = [0, 0], sizes = [16, 16], strides = [1, 1]} : vector<16x32xf32> to vector<16x16xf32>
    %23 = vector.shape_cast %22 : vector<16x16xf32> to vector<1x16x16xf32>
    %24 = vector.broadcast %23 : vector<1x16x16xf32> to vector<10x16x16xf32>
    %25 = arith.mulf %21, %24 : vector<10x16x16xf32>
    %cst_19 = arith.constant dense<0.000000e+00> : vector<10x16xf32>
    %26 = vector.multi_reduction <add>, %25, %cst_19 [2] : vector<10x16x16xf32> to vector<10x16xf32>
    %cst_20 = arith.constant dense<0.000000e+00> : vector<10xf32>
    %27 = vector.multi_reduction <add>, %26, %cst_20 [1] : vector<10x16xf32> to vector<10xf32>
    %28 = vector.extract_strided_slice %20 {offsets = [0, 16], sizes = [16, 16], strides = [1, 1]} : vector<16x32xf32> to vector<16x16xf32>
    %29 = vector.shape_cast %28 : vector<16x16xf32> to vector<1x16x16xf32>
    %30 = vector.broadcast %29 : vector<1x16x16xf32> to vector<10x16x16xf32>
    %31 = arith.mulf %21, %30 : vector<10x16x16xf32>
    %cst_21 = arith.constant dense<0.000000e+00> : vector<10x16xf32>
    %32 = vector.multi_reduction <add>, %31, %cst_21 [2] : vector<10x16x16xf32> to vector<10x16xf32>
    %cst_22 = arith.constant dense<0.000000e+00> : vector<10xf32>
    %33 = vector.multi_reduction <add>, %32, %cst_22 [1] : vector<10x16xf32> to vector<10xf32>
    %34 = vector.shape_cast %27 : vector<10xf32> to vector<1x10xf32>
    %35 = vector.shape_cast %33 : vector<10xf32> to vector<1x10xf32>
    %36 = tpu.concatenate %34, %35 in 0 : vector<1x10xf32>, vector<1x10xf32> -> vector<2x10xf32>
    %c0_23 = arith.constant 0 : index
    %c0_24 = arith.constant 0 : index
    %37 = vector.load %arg5[%c0_23, %c0_24] : memref<1x10xf32, #tpu.memory_space<vmem>>, vector<1x10xf32>
    %38 = vector.broadcast %37 : vector<1x10xf32> to vector<2x10xf32>
    %39 = arith.addf %36, %38 : vector<2x10xf32>
    %40 = arith.negf %39 : vector<2x10xf32>
    %41 = math.exp %40 : vector<2x10xf32>
    %cst_25 = arith.constant 1.000000e+00 : f32
    %42 = vector.broadcast %cst_25 : f32 to vector<2x10xf32>
    %43 = arith.addf %42, %41 : vector<2x10xf32>
    %44 = arith.divf %42, %43 : vector<2x10xf32>
    %c0_26 = arith.constant 0 : index
    %c0_27 = arith.constant 0 : index
    %45 = vector.load %arg6[%c0_26, %c0_27] : memref<2x10xf32, #tpu.memory_space<vmem>>, vector<2x10xf32>
    tpu.vector_store %arg6[%c0_26, %c0_27], %44 {strides = array<i32>} : memref<2x10xf32, #tpu.memory_space<vmem>>, vector<2x10xf32>,
    return
  }
  func.func @transform_0(%arg0: i32) -> (i32, i32, i32) {
    %c0_i32 = arith.constant 0 : i32
    %c0_i32_0 = arith.constant 0 : i32
    %c0_i32_1 = arith.constant 0 : i32
    %c0_i32_2 = arith.constant 0 : i32
    return %c0_i32, %c0_i32_0, %c0_i32_1 : i32, i32, i32
  }
  func.func @transform_1(%arg0: i32) -> (i32, i32) {
    %c0_i32 = arith.constant 0 : i32
    %c0_i32_0 = arith.constant 0 : i32
    %c0_i32_1 = arith.constant 0 : i32
    return %c0_i32, %c0_i32_0 : i32, i32
  }
  func.func @transform_2(%arg0: i32) -> (i32, i32) {
    %c0_i32 = arith.constant 0 : i32
    %c0_i32_0 = arith.constant 0 : i32
    %c0_i32_1 = arith.constant 0 : i32
    return %c0_i32, %c0_i32_0 : i32, i32
  }
  func.func @transform_3(%arg0: i32) -> (i32, i32, i32) {
    %c0_i32 = arith.constant 0 : i32
    %c0_i32_0 = arith.constant 0 : i32
    %c0_i32_1 = arith.constant 0 : i32
    %c0_i32_2 = arith.constant 0 : i32
    return %c0_i32, %c0_i32_0, %c0_i32_1 : i32, i32, i32
  }
  func.func @transform_4(%arg0: i32) -> (i32, i32) {
    %c0_i32 = arith.constant 0 : i32
    %c0_i32_0 = arith.constant 0 : i32
    %c0_i32_1 = arith.constant 0 : i32
    return %c0_i32, %c0_i32_0 : i32, i32
  }
  func.func @transform_5(%arg0: i32) -> (i32, i32) {
    %c0_i32 = arith.constant 0 : i32
    %c0_i32_0 = arith.constant 0 : i32
    %c0_i32_1 = arith.constant 0 : i32
    return %c0_i32, %c0_i32_0 : i32, i32
  }
}

</mosaic_0001>

<llo_original>
// kernel: lenet_forward.2
$region0: #{lenet_forward.2}
  #allocation0 [shape = 'u32[]', space=smem, size = 0x4, offset = 0x4, fixed_abs, tag = 'smem constant byte address 0x4 - core index']
  #allocation1 [shape = 'u32[144,128]{1,0:T(1,128)}', space=vmem, size = 0x12000, scoped, tag = 'internal scratch']
  %s0 = inlined_call_operand.vmem [shape: f32[4,25,288], index: 0, kind: input, shape index: {}]
  %s1 = inlined_call_operand.vmem [shape: f32[6,25], index: 1, kind: input, shape index: {}]
  %s2 = inlined_call_operand.vmem [shape: f32[6,1], index: 2, kind: input, shape index: {}]
  %s3 = inlined_call_operand.vmem [shape: f32[6,288], index: 3, kind: output, shape index: {}]
  %s4 = sld [smem:[#allocation0]]
  $region22: #{lenet_forward.2} parent=0
    _
  %s6 = ssub.s32 1, %s4
  %s7 = scalar_select 0, %s6, %s4
  // Predicated region
  $region2: #{lenet_forward.2} parent=0 // pred_check
    _
  $region3: #{lenet_forward.2} parent=0 // pred_check_branch
    %9 = sbr.rel (0) target = $region5
  $region4: #{lenet_forward.2} parent=0 // pred_region
    _
  $region5: #{lenet_forward.2} parent=0 // pred_fallthru
    _
  // Predicated region
  $region6: #{lenet_forward.2} parent=0 // pred_check
    _
  $region7: #{lenet_forward.2} parent=0 // pred_check_branch
    %11 = sbr.rel (0) target = $region9
  $region8: #{lenet_forward.2} parent=0 // pred_region
    _
  $region9: #{lenet_forward.2} parent=0 // pred_fallthru
    _
  // Predicated region
  $region10: #{lenet_forward.2} parent=0 // pred_check
    _
  $region11: #{lenet_forward.2} parent=0 // pred_check_branch
    %13 = sbr.rel (0) target = $region13
  $region12: #{lenet_forward.2} parent=0 // pred_region
    _
  $region13: #{lenet_forward.2} parent=0 // pred_fallthru
    _
  %v14 = vld [vmem:[%s1] sm:$0x3f]
  %v15 = vld [vmem:[%s0] sm:$0xff]
  %v16 = vld [vmem:[%s0 + $0x8] sm:$0xff]
  %v17 = vld [vmem:[%s0 + $0x10] sm:$0xff]
  %v18 = vld [vmem:[%s0 + $0x18] sm:$0xff]
  %v19 = vld [vmem:[%s0 + $0x20] sm:$0xff]
  %v20 = vld [vmem:[%s0 + $0x28] sm:$0xff]
  %v21 = vld [vmem:[%s0 + $0x30] sm:$0xff]
  %v22 = vld [vmem:[%s0 + $0x38] sm:$0xff]
  %v23 = vld [vmem:[%s0 + $0x40] sm:$0xff]
  %v24 = vld [vmem:[%s0 + $0x48] sm:$0x1]
  %v25 = vld [vmem:[%s0 + $0x50] sm:$0x1]
  %v26 = vld [vmem:[%s0 + $0x58] sm:$0x1]
  %vm27 = vcmask 203776
  %v29 = vsel %vm27, %v14, 0
  %vm31 = vcmask 1040384
  %v33 = vsel %vm31, %v24, 0
  %v36 = vsel %vm31, %v25, 0
  %v39 = vsel %vm31, %v26, 0
  %41 = vmatprep.subr.mxu0 0.0
  %42 = vmatpush1.msra.mxu0 0.0
  %43 = vmatprep.subr.mxu0 0.0
  %44 = vmatpush1.msra.mxu0 0.0
  %45 = vmatprep.subr.mxu0 0.0
  %46 = vmatpush1.msra.mxu0 0.0
  %47 = vmatprep.subr.mxu0 0.0
  %48 = vmatpush1.msra.mxu0 0.0
  %49 = vmatprep.subr.mxu0 0.0
  %50 = vmatpush1.msra.mxu0 0.0
  %51 = vmatprep.subr.mxu0 0.0
  %52 = vmatpush1.msra.mxu0 0.0
  %53 = vmatprep.subr.mxu0 0.0
  %54 = vmatpush1.msra.mxu0 0.0
  %55 = vmatprep.subr.mxu0 0.0
  %56 = vmatpush1.msra.mxu0 0.0
  %57 = vmatprep.subr.mxu0 0.0
  %58 = vmatpush1.msra.mxu0 0.0
  %59 = vmatprep.subr.mxu0 0.0
  %60 = vmatpush1.msra.mxu0 0.0
  %61 = vmatprep.subr.mxu0 0.0
  %62 = vmatpush1.msra.mxu0 0.0
  %63 = vmatprep.subr.mxu0 0.0
  %64 = vmatpush1.msra.mxu0 0.0
  %65 = vmatprep.subr.mxu0 %v36
  %66 = vmatpush1.msra.mxu0 %v33
  %67 = vmatprep.subr.mxu0 %v22
  %68 = vmatpush1.msra.mxu0 %v21
  %69 = vmatprep.subr.mxu0 %v19
  %70 = vmatpush1.msra.mxu0 %v18
  %71 = vmatprep.subr.mxu0 %v16
  %72 = vmatpush1.msra.mxu0 %v15
  %73 = vmatprep.subr.mxu0 0.0
  %74 = vmatpush2.msra.mxu0 0.0
  %75 = vmatprep.subr.mxu0 0.0
  %76 = vmatpush2.msra.mxu0 0.0
  %77 = vmatprep.subr.mxu0 0.0
  %78 = vmatpush2.msra.mxu0 0.0
  %79 = vmatprep.subr.mxu0 0.0
  %80 = vmatpush2.msra.mxu0 0.0
  %81 = vmatprep.subr.mxu0 0.0
  %82 = vmatpush2.msra.mxu0 0.0
  %83 = vmatprep.subr.mxu0 0.0
  %84 = vmatpush2.msra.mxu0 0.0
  %85 = vmatprep.subr.mxu0 0.0
  %86 = vmatpush2.msra.mxu0 0.0
  %87 = vmatprep.subr.mxu0 0.0
  %88 = vmatpush2.msra.mxu0 0.0
  %89 = vmatprep.subr.mxu0 0.0
  %90 = vmatpush2.msra.mxu0 0.0
  %91 = vmatprep.subr.mxu0 0.0
  %92 = vmatpush2.msra.mxu0 0.0
  %93 = vmatprep.subr.mxu0 0.0
  %94 = vmatpush2.msra.mxu0 0.0
  %95 = vmatprep.subr.mxu0 0.0
  %96 = vmatpush2.msra.mxu0 0.0
  %97 = vmatprep.subr.mxu0 0.0
  %98 = vmatpush2.msra.mxu0 0.0
  %99 = vmatprep.subr.mxu0 0.0
  %100 = vmatpush2.msra.mxu0 0.0
  %101 = vmatprep.subr.mxu0 0.0
  %102 = vmatpush2.msra.mxu0 0.0
  %103 = vmatprep.subr.mxu0 0.0
  %104 = vmatpush2.msra.mxu0 0.0
  %105 = vmatprep.mubr.f32.mxu0 0.0
  %106 = vmatmul.mubr.f32.gmra.mxu0 %v29
  %v107 = vpop.f32.mrf.mxu0
  %v108 = vadd.f32 0.0, %v107
  %v109 = vpop.f32.mrf.mxu0
  %v110 = vadd.f32 0.0, %v109
  %111 = vdwg.mxu0
  %112 = vmatprep.subr.mxu0 0.0
  %113 = vmatpush1.msra.mxu0 0.0
  %114 = vmatprep.subr.mxu0 0.0
  %115 = vmatpush1.msra.mxu0 0.0
  %116 = vmatprep.subr.mxu0 0.0
  %117 = vmatpush1.msra.mxu0 0.0
  %118 = vmatprep.subr.mxu0 0.0
  %119 = vmatpush1.msra.mxu0 0.0
  %120 = vmatprep.subr.mxu0 0.0
  %121 = vmatpush1.msra.mxu0 0.0
  %122 = vmatprep.subr.mxu0 0.0
  %123 = vmatpush1.msra.mxu0 0.0
  %124 = vmatprep.subr.mxu0 0.0
  %125 = vmatpush1.msra.mxu0 0.0
  %126 = vmatprep.subr.mxu0 0.0
  %127 = vmatpush1.msra.mxu0 0.0
  %128 = vmatprep.subr.mxu0 0.0
  %129 = vmatpush1.msra.mxu0 0.0
  %130 = vmatprep.subr.mxu0 0.0
  %131 = vmatpush1.msra.mxu0 0.0
  %132 = vmatprep.subr.mxu0 0.0
  %133 = vmatpush1.msra.mxu0 0.0
  %134 = vmatprep.subr.mxu0 0.0
  %135 = vmatpush1.msra.mxu0 0.0
  %136 = vmatprep.subr.mxu0 0.0
  %137 = vmatpush1.msra.mxu0 %v39
  %138 = vmatprep.subr.mxu0 0.0
  %139 = vmatpush1.msra.mxu0 %v23
  %140 = vmatprep.subr.mxu0 0.0
  %141 = vmatpush1.msra.mxu0 %v20
  %142 = vmatprep.subr.mxu0 0.0
  %143 = vmatpush1.msra.mxu0 %v17
  %144 = vmatprep.subr.mxu0 0.0
  %145 = vmatpush2.msra.mxu0 0.0
  %146 = vmatprep.subr.mxu0 0.0
  %147 = vmatpush2.msra.mxu0 0.0
  %148 = vmatprep.subr.mxu0 0.0
  %149 = vmatpush2.msra.mxu0 0.0
  %150 = vmatprep.subr.mxu0 0.0
  %151 = vmatpush2.msra.mxu0 0.0
  %152 = vmatprep.subr.mxu0 0.0
  %153 = vmatpush2.msra.mxu0 0.0
  %154 = vmatprep.subr.mxu0 0.0
  %155 = vmatpush2.msra.mxu0 0.0
  %156 = vmatprep.subr.mxu0 0.0
  %157 = vmatpush2.msra.mxu0 0.0
  %158 = vmatprep.subr.mxu0 0.0
  %159 = vmatpush2.msra.mxu0 0.0
  %160 = vmatprep.subr.mxu0 0.0
  %161 = vmatpush2.msra.mxu0 0.0
  %162 = vmatprep.subr.mxu0 0.0
  %163 = vmatpush2.msra.mxu0 0.0
  %164 = vmatprep.subr.mxu0 0.0
  %165 = vmatpush2.msra.mxu0 0.0
  %166 = vmatprep.subr.mxu0 0.0
  %167 = vmatpush2.msra.mxu0 0.0
  %168 = vmatprep.subr.mxu0 0.0
  %169 = vmatpush2.msra.mxu0 0.0
  %170 = vmatprep.subr.mxu0 0.0
  %171 = vmatpush2.msra.mxu0 0.0
  %172 = vmatprep.subr.mxu0 0.0
  %173 = vmatpush2.msra.mxu0 0.0
  %174 = vmatprep.subr.mxu0 0.0
  %175 = vmatpush2.msra.mxu0 0.0
  %176 = vmatprep.mubr.f32.mxu0 0.0
  %177 = vmatmul.mubr.f32.gmra.mxu0 %v29
  %v178 = vpop.f32.mrf.mxu0
  %v179 = vadd.f32 0.0, %v178
  %v180 = vpop.f32.mrf.mxu0
  %181 = vdwg.mxu0
  %s182 = scalar_lea.vmem %s0, 96
  %v183 = vld [vmem:[%s182] sm:$0xff]
  %v184 = vld [vmem:[%s182 + $0x8] sm:$0xff]
  %v185 = vld [vmem:[%s182 + $0x10] sm:$0xff]
  %v186 = vld [vmem:[%s182 + $0x18] sm:$0xff]
  %v187 = vld [vmem:[%s182 + $0x20] sm:$0xff]
  %v188 = vld [vmem:[%s182 + $0x28] sm:$0xff]
  %v189 = vld [vmem:[%s182 + $0x30] sm:$0xff]
  %v190 = vld [vmem:[%s182 + $0x38] sm:$0xff]
  %v191 = vld [vmem:[%s182 + $0x40] sm:$0xff]
  %v192 = vld [vmem:[%s182 + $0x48] sm:$0x1]
  %v193 = vld [vmem:[%s182 + $0x50] sm:$0x1]
  %v194 = vld [vmem:[%s182 + $0x58] sm:$0x1]
  %v196 = vsel %vm31, %v192, 0
  %v199 = vsel %vm31, %v193, 0
  %v202 = vsel %vm31, %v194, 0
  %204 = vmatprep.subr.mxu0 0.0
  %205 = vmatpush1.msra.mxu0 0.0
  %206 = vmatprep.subr.mxu0 0.0
  %207 = vmatpush1.msra.mxu0 0.0
  %208 = vmatprep.subr.mxu0 0.0
  %209 = vmatpush1.msra.mxu0 0.0
  %210 = vmatprep.subr.mxu0 0.0
  %211 = vmatpush1.msra.mxu0 0.0
  %212 = vmatprep.subr.mxu0 0.0
  %213 = vmatpush1.msra.mxu0 0.0
  %214 = vmatprep.subr.mxu0 0.0
  %215 = vmatpush1.msra.mxu0 0.0
  %216 = vmatprep.subr.mxu0 0.0
  %217 = vmatpush1.msra.mxu0 0.0
  %218 = vmatprep.subr.mxu0 0.0
  %219 = vmatpush1.msra.mxu0 0.0
  %220 = vmatprep.subr.mxu0 0.0
  %221 = vmatpush1.msra.mxu0 0.0
  %222 = vmatprep.subr.mxu0 0.0
  %223 = vmatpush1.msra.mxu0 0.0
  %224 = vmatprep.subr.mxu0 0.0
  %225 = vmatpush1.msra.mxu0 0.0
  %226 = vmatprep.subr.mxu0 0.0
  %227 = vmatpush1.msra.mxu0 0.0
  %228 = vmatprep.subr.mxu0 %v199
  %229 = vmatpush1.msra.mxu0 %v196
  %230 = vmatprep.subr.mxu0 %v190
  %231 = vmatpush1.msra.mxu0 %v189
  %232 = vmatprep.subr.mxu0 %v187
  %233 = vmatpush1.msra.mxu0 %v186
  %234 = vmatprep.subr.mxu0 %v184
  %235 = vmatpush1.msra.mxu0 %v183
  %236 = vmatprep.subr.mxu0 0.0
  %237 = vmatpush2.msra.mxu0 0.0
  %238 = vmatprep.subr.mxu0 0.0
  %239 = vmatpush2.msra.mxu0 0.0
  %240 = vmatprep.subr.mxu0 0.0
  %241 = vmatpush2.msra.mxu0 0.0
  %242 = vmatprep.subr.mxu0 0.0
  %243 = vmatpush2.msra.mxu0 0.0
  %244 = vmatprep.subr.mxu0 0.0
  %245 = vmatpush2.msra.mxu0 0.0
  %246 = vmatprep.subr.mxu0 0.0
  %247 = vmatpush2.msra.mxu0 0.0
  %248 = vmatprep.subr.mxu0 0.0
  %249 = vmatpush2.msra.mxu0 0.0
  %250 = vmatprep.subr.mxu0 0.0
  %251 = vmatpush2.msra.mxu0 0.0
  %252 = vmatprep.subr.mxu0 0.0
  %253 = vmatpush2.msra.mxu0 0.0
  %254 = vmatprep.subr.mxu0 0.0
  %255 = vmatpush2.msra.mxu0 0.0
  %256 = vmatprep.subr.mxu0 0.0
  %257 = vmatpush2.msra.mxu0 0.0
  %258 = vmatprep.subr.mxu0 0.0
  %259 = vmatpush2.msra.mxu0 0.0
  %260 = vmatprep.subr.mxu0 0.0
  %261 = vmatpush2.msra.mxu0 0.0
  %262 = vmatprep.subr.mxu0 0.0
  %263 = vmatpush2.msra.mxu0 0.0
  %264 = vmatprep.subr.mxu0 0.0
  %265 = vmatpush2.msra.mxu0 0.0
  %266 = vmatprep.subr.mxu0 0.0
  %267 = vmatpush2.msra.mxu0 0.0
  %268 = vmatprep.mubr.f32.mxu0 0.0
  %269 = vmatmul.mubr.f32.gmra.mxu0 %v29
  %v270 = vpop.f32.mrf.mxu0
  %v271 = vadd.f32 0.0, %v270
  %v272 = vpop.f32.mrf.mxu0
  %v273 = vadd.f32 0.0, %v272
  %274 = vdwg.mxu0
  %275 = vmatprep.subr.mxu0 0.0
  %276 = vmatpush1.msra.mxu0 0.0
  %277 = vmatprep.subr.mxu0 0.0
  %278 = vmatpush1.msra.mxu0 0.0
  %279 = vmatprep.subr.mxu0 0.0
  %280 = vmatpush1.msra.mxu0 0.0
  %281 = vmatprep.subr.mxu0 0.0
  %282 = vmatpush1.msra.mxu0 0.0
  %283 = vmatprep.subr.mxu0 0.0
  %284 = vmatpush1.msra.mxu0 0.0
  %285 = vmatprep.subr.mxu0 0.0
  %286 = vmatpush1.msra.mxu0 0.0
  %287 = vmatprep.subr.mxu0 0.0
  %288 = vmatpush1.msra.mxu0 0.0
  %289 = vmatprep.subr.mxu0 0.0
  %290 = vmatpush1.msra.mxu0 0.0
  %291 = vmatprep.subr.mxu0 0.0
  %292 = vmatpush1.msra.mxu0 0.0
  %293 = vmatprep.subr.mxu0 0.0
  %294 = vmatpush1.msra.mxu0 0.0
  %295 = vmatprep.subr.mxu0 0.0
  %296 = vmatpush1.msra.mxu0 0.0
  %297 = vmatprep.subr.mxu0 0.0
  %298 = vmatpush1.msra.mxu0 0.0
  %299 = vmatprep.subr.mxu0 0.0
  %300 = vmatpush1.msra.mxu0 %v202
  %301 = vmatprep.subr.mxu0 0.0
  %302 = vmatpush1.msra.mxu0 %v191
  %303 = vmatprep.subr.mxu0 0.0
  %304 = vmatpush1.msra.mxu0 %v188
  %305 = vmatprep.subr.mxu0 0.0
  %306 = vmatpush1.msra.mxu0 %v185
  %307 = vmatprep.subr.mxu0 0.0
  %308 = vmatpush2.msra.mxu0 0.0
  %309 = vmatprep.subr.mxu0 0.0
  %310 = vmatpush2.msra.mxu0 0.0
  %311 = vmatprep.subr.mxu0 0.0
  %312 = vmatpush2.msra.mxu0 0.0
  %313 = vmatprep.subr.mxu0 0.0
  %314 = vmatpush2.msra.mxu0 0.0
  %315 = vmatprep.subr.mxu0 0.0
  %316 = vmatpush2.msra.mxu0 0.0
  %317 = vmatprep.subr.mxu0 0.0
  %318 = vmatpush2.msra.mxu0 0.0
  %319 = vmatprep.subr.mxu0 0.0
  %320 = vmatpush2.msra.mxu0 0.0
  %321 = vmatprep.subr.mxu0 0.0
  %322 = vmatpush2.msra.mxu0 0.0
  %323 = vmatprep.subr.mxu0 0.0
  %324 = vmatpush2.msra.mxu0 0.0
  %325 = vmatprep.subr.mxu0 0.0
  %326 = vmatpush2.msra.mxu0 0.0
  %327 = vmatprep.subr.mxu0 0.0
  %328 = vmatpush2.msra.mxu0 0.0
  %329 = vmatprep.subr.mxu0 0.0
  %330 = vmatpush2.msra.mxu0 0.0
  %331 = vmatprep.subr.mxu0 0.0
  %332 = vmatpush2.msra.mxu0 0.0
  %333 = vmatprep.subr.mxu0 0.0
  %334 = vmatpush2.msra.mxu0 0.0
  %335 = vmatprep.subr.mxu0 0.0
  %336 = vmatpush2.msra.mxu0 0.0
  %337 = vmatprep.subr.mxu0 0.0
  %338 = vmatpush2.msra.mxu0 0.0
  %339 = vmatprep.mubr.f32.mxu0 0.0
  %340 = vmatmul.mubr.f32.gmra.mxu0 %v29
  %v341 = vpop.f32.mrf.mxu0
  %v342 = vadd.f32 0.0, %v341
  %v343 = vpop.f32.mrf.mxu0
  %344 = vdwg.mxu0
  %v345 = vmax.f32 %v108, %v271
  %v346 = vmax.f32 %v110, %v273
  %v347 = vmax.f32 %v179, %v342
  %s348 = scalar_lea.vmem %s0, 192
  %v349 = vld [vmem:[%s348] sm:$0xff]
  %v350 = vld [vmem:[%s348 + $0x8] sm:$0xff]
  %v351 = vld [vmem:[%s348 + $0x10] sm:$0xff]
  %v352 = vld [vmem:[%s348 + $0x18] sm:$0xff]
  %v353 = vld [vmem:[%s348 + $0x20] sm:$0xff]
  %v354 = vld [vmem:[%s348 + $0x28] sm:$0xff]
  %v355 = vld [vmem:[%s348 + $0x30] sm:$0xff]
  %v356 = vld [vmem:[%s348 + $0x38] sm:$0xff]
  %v357 = vld [vmem:[%s348 + $0x40] sm:$0xff]
  %v358 = vld [vmem:[%s348 + $0x48] sm:$0x1]
  %v359 = vld [vmem:[%s348 + $0x50] sm:$0x1]
  %v360 = vld [vmem:[%s348 + $0x58] sm:$0x1]
  %v362 = vsel %vm31, %v358, 0
  %v365 = vsel %vm31, %v359, 0
  %v368 = vsel %vm31, %v360, 0
  %370 = vmatprep.subr.mxu0 0.0
  %371 = vmatpush1.msra.mxu0 0.0
  %372 = vmatprep.subr.mxu0 0.0
  %373 = vmatpush1.msra.mxu0 0.0
  %374 = vmatprep.subr.mxu0 0.0
  %375 = vmatpush1.msra.mxu0 0.0
  %376 = vmatprep.subr.mxu0 0.0
  %377 = vmatpush1.msra.mxu0 0.0
  %378 = vmatprep.subr.mxu0 0.0
  %379 = vmatpush1.msra.mxu0 0.0
  %380 = vmatprep.subr.mxu0 0.0
  %381 = vmatpush1.msra.mxu0 0.0
  %382 = vmatprep.subr.mxu0 0.0
  %383 = vmatpush1.msra.mxu0 0.0
  %384 = vmatprep.subr.mxu0 0.0
  %385 = vmatpush1.msra.mxu0 0.0
  %386 = vmatprep.subr.mxu0 0.0
  %387 = vmatpush1.msra.mxu0 0.0
  %388 = vmatprep.subr.mxu0 0.0
  %389 = vmatpush1.msra.mxu0 0.0
  %390 = vmatprep.subr.mxu0 0.0
  %391 = vmatpush1.msra.mxu0 0.0
  %392 = vmatprep.subr.mxu0 0.0
  %393 = vmatpush1.msra.mxu0 0.0
  %394 = vmatprep.subr.mxu0 %v365
  %395 = vmatpush1.msra.mxu0 %v362
  %396 = vmatprep.subr.mxu0 %v356
  %397 = vmatpush1.msra.mxu0 %v355
  %398 = vmatprep.subr.mxu0 %v353
  %399 = vmatpush1.msra.mxu0 %v352
  %400 = vmatprep.subr.mxu0 %v350
  %401 = vmatpush1.msra.mxu0 %v349
  %402 = vmatprep.subr.mxu0 0.0
  %403 = vmatpush2.msra.mxu0 0.0
  %404 = vmatprep.subr.mxu0 0.0
  %405 = vmatpush2.msra.mxu0 0.0
  %406 = vmatprep.subr.mxu0 0.0
  %407 = vmatpush2.msra.mxu0 0.0
  %408 = vmatprep.subr.mxu0 0.0
  %409 = vmatpush2.msra.mxu0 0.0
  %410 = vmatprep.subr.mxu0 0.0
  %411 = vmatpush2.msra.mxu0 0.0
  %412 = vmatprep.subr.mxu0 0.0
  %413 = vmatpush2.msra.mxu0 0.0
  %414 = vmatprep.subr.mxu0 0.0
  %415 = vmatpush2.msra.mxu0 0.0
  %416 = vmatprep.subr.mxu0 0.0
  %417 = vmatpush2.msra.mxu0 0.0
  %418 = vmatprep.subr.mxu0 0.0
  %419 = vmatpush2.msra.mxu0 0.0
  %420 = vmatprep.subr.mxu0 0.0
  %421 = vmatpush2.msra.mxu0 0.0
  %422 = vmatprep.subr.mxu0 0.0
  %423 = vmatpush2.msra.mxu0 0.0
  %424 = vmatprep.subr.mxu0 0.0
  %425 = vmatpush2.msra.mxu0 0.0
  %426 = vmatprep.subr.mxu0 0.0
  %427 = vmatpush2.msra.mxu0 0.0
  %428 = vmatprep.subr.mxu0 0.0
  %429 = vmatpush2.msra.mxu0 0.0
  %430 = vmatprep.subr.mxu0 0.0
  %431 = vmatpush2.msra.mxu0 0.0
  %432 = vmatprep.subr.mxu0 0.0
  %433 = vmatpush2.msra.mxu0 0.0
  %434 = vmatprep.mubr.f32.mxu0 0.0
  %435 = vmatmul.mubr.f32.gmra.mxu0 %v29
  %v436 = vpop.f32.mrf.mxu0
  %v437 = vadd.f32 0.0, %v436
  %v438 = vpop.f32.mrf.mxu0
  %v439 = vadd.f32 0.0, %v438
  %440 = vdwg.mxu0
  %441 = vmatprep.subr.mxu0 0.0
  %442 = vmatpush1.msra.mxu0 0.0
  %443 = vmatprep.subr.mxu0 0.0
  %444 = vmatpush1.msra.mxu0 0.0
  %445 = vmatprep.subr.mxu0 0.0
  %446 = vmatpush1.msra.mxu0 0.0
  %447 = vmatprep.subr.mxu0 0.0
  %448 = vmatpush1.msra.mxu0 0.0
  %449 = vmatprep.subr.mxu0 0.0
  %450 = vmatpush1.msra.mxu0 0.0
  %451 = vmatprep.subr.mxu0 0.0
  %452 = vmatpush1.msra.mxu0 0.0
  %453 = vmatprep.subr.mxu0 0.0
  %454 = vmatpush1.msra.mxu0 0.0
  %455 = vmatprep.subr.mxu0 0.0
  %456 = vmatpush1.msra.mxu0 0.0
  %457 = vmatprep.subr.mxu0 0.0
  %458 = vmatpush1.msra.mxu0 0.0
  %459 = vmatprep.subr.mxu0 0.0
  %460 = vmatpush1.msra.mxu0 0.0
  %461 = vmatprep.subr.mxu0 0.0
  %462 = vmatpush1.msra.mxu0 0.0
  %463 = vmatprep.subr.mxu0 0.0
  %464 = vmatpush1.msra.mxu0 0.0
  %465 = vmatprep.subr.mxu0 0.0
  %466 = vmatpush1.msra.mxu0 %v368
  %467 = vmatprep.subr.mxu0 0.0
  %468 = vmatpush1.msra.mxu0 %v357
  %469 = vmatprep.subr.mxu0 0.0
  %470 = vmatpush1.msra.mxu0 %v354
  %471 = vmatprep.subr.mxu0 0.0
  %472 = vmatpush1.msra.mxu0 %v351
  %473 = vmatprep.subr.mxu0 0.0
  %474 = vmatpush2.msra.mxu0 0.0
  %475 = vmatprep.subr.mxu0 0.0
  %476 = vmatpush2.msra.mxu0 0.0
  %477 = vmatprep.subr.mxu0 0.0
  %478 = vmatpush2.msra.mxu0 0.0
  %479 = vmatprep.subr.mxu0 0.0
  %480 = vmatpush2.msra.mxu0 0.0
  %481 = vmatprep.subr.mxu0 0.0
  %482 = vmatpush2.msra.mxu0 0.0
  %483 = vmatprep.subr.mxu0 0.0
  %484 = vmatpush2.msra.mxu0 0.0
  %485 = vmatprep.subr.mxu0 0.0
  %486 = vmatpush2.msra.mxu0 0.0
  %487 = vmatprep.subr.mxu0 0.0
  %488 = vmatpush2.msra.mxu0 0.0
  %489 = vmatprep.subr.mxu0 0.0
  %490 = vmatpush2.msra.mxu0 0.0
  %491 = vmatprep.subr.mxu0 0.0
  %492 = vmatpush2.msra.mxu0 0.0
  %493 = vmatprep.subr.mxu0 0.0
  %494 = vmatpush2.msra.mxu0 0.0
  %495 = vmatprep.subr.mxu0 0.0
  %496 = vmatpush2.msra.mxu0 0.0
  %497 = vmatprep.subr.mxu0 0.0
  %498 = vmatpush2.msra.mxu0 0.0
  %499 = vmatprep.subr.mxu0 0.0
  %500 = vmatpush2.msra.mxu0 0.0
  %501 = vmatprep.subr.mxu0 0.0
  %502 = vmatpush2.msra.mxu0 0.0
  %503 = vmatprep.subr.mxu0 0.0
  %504 = vmatpush2.msra.mxu0 0.0
  %505 = vmatprep.mubr.f32.mxu0 0.0
  %506 = vmatmul.mubr.f32.gmra.mxu0 %v29
  %v507 = vpop.f32.mrf.mxu0
  %v508 = vadd.f32 0.0, %v507
  %v509 = vpop.f32.mrf.mxu0
  %510 = vdwg.mxu0
  %v511 = vmax.f32 %v345, %v437
  %v512 = vmax.f32 %v346, %v439
  %v513 = vmax.f32 %v347, %v508
  %s514 = scalar_lea.vmem %s0, 288
  %v515 = vld [vmem:[%s514] sm:$0xff]
  %v516 = vld [vmem:[%s514 + $0x8] sm:$0xff]
  %v517 = vld [vmem:[%s514 + $0x10] sm:$0xff]
  %v518 = vld [vmem:[%s514 + $0x18] sm:$0xff]
  %v519 = vld [vmem:[%s514 + $0x20] sm:$0xff]
  %v520 = vld [vmem:[%s514 + $0x28] sm:$0xff]
  %v521 = vld [vmem:[%s514 + $0x30] sm:$0xff]
  %v522 = vld [vmem:[%s514 + $0x38] sm:$0xff]
  %v523 = vld [vmem:[%s514 + $0x40] sm:$0xff]
  %v524 = vld [vmem:[%s514 + $0x48] sm:$0x1]
  %v525 = vld [vmem:[%s514 + $0x50] sm:$0x1]
  %v526 = vld [vmem:[%s514 + $0x58] sm:$0x1]
  %v528 = vsel %vm31, %v524, 0
  %v531 = vsel %vm31, %v525, 0
  %v534 = vsel %vm31, %v526, 0
  %536 = vmatprep.subr.mxu0 0.0
  %537 = vmatpush1.msra.mxu0 0.0
  %538 = vmatprep.subr.mxu0 0.0
  %539 = vmatpush1.msra.mxu0 0.0
  %540 = vmatprep.subr.mxu0 0.0
  %541 = vmatpush1.msra.mxu0 0.0
  %542 = vmatprep.subr.mxu0 0.0
  %543 = vmatpush1.msra.mxu0 0.0
  %544 = vmatprep.subr.mxu0 0.0
  %545 = vmatpush1.msra.mxu0 0.0
  %546 = vmatprep.subr.mxu0 0.0
  %547 = vmatpush1.msra.mxu0 0.0
  %548 = vmatprep.subr.mxu0 0.0
  %549 = vmatpush1.msra.mxu0 0.0
  %550 = vmatprep.subr.mxu0 0.0
  %551 = vmatpush1.msra.mxu0 0.0
  %552 = vmatprep.subr.mxu0 0.0
  %553 = vmatpush1.msra.mxu0 0.0
  %554 = vmatprep.subr.mxu0 0.0
  %555 = vmatpush1.msra.mxu0 0.0
  %556 = vmatprep.subr.mxu0 0.0
  %557 = vmatpush1.msra.mxu0 0.0
  %558 = vmatprep.subr.mxu0 0.0
  %559 = vmatpush1.msra.mxu0 0.0
  %560 = vmatprep.subr.mxu0 %v531
  %561 = vmatpush1.msra.mxu0 %v528
  %562 = vmatprep.subr.mxu0 %v522
  %563 = vmatpush1.msra.mxu0 %v521
  %564 = vmatprep.subr.mxu0 %v519
  %565 = vmatpush1.msra.mxu0 %v518
  %566 = vmatprep.subr.mxu0 %v516
  %567 = vmatpush1.msra.mxu0 %v515
  %568 = vmatprep.subr.mxu0 0.0
  %569 = vmatpush2.msra.mxu0 0.0
  %570 = vmatprep.subr.mxu0 0.0
  %571 = vmatpush2.msra.mxu0 0.0
  %572 = vmatprep.subr.mxu0 0.0
  %573 = vmatpush2.msra.mxu0 0.0
  %574 = vmatprep.subr.mxu0 0.0
  %575 = vmatpush2.msra.mxu0 0.0
  %576 = vmatprep.subr.mxu0 0.0
  %577 = vmatpush2.msra.mxu0 0.0
  %578 = vmatprep.subr.mxu0 0.0
  %579 = vmatpush2.msra.mxu0 0.0
  %580 = vmatprep.subr.mxu0 0.0
  %581 = vmatpush2.msra.mxu0 0.0
  %582 = vmatprep.subr.mxu0 0.0
  %583 = vmatpush2.msra.mxu0 0.0
  %584 = vmatprep.subr.mxu0 0.0
  %585 = vmatpush2.msra.mxu0 0.0
  %586 = vmatprep.subr.mxu0 0.0
  %587 = vmatpush2.msra.mxu0 0.0
  %588 = vmatprep.subr.mxu0 0.0
  %589 = vmatpush2.msra.mxu0 0.0
  %590 = vmatprep.subr.mxu0 0.0
  %591 = vmatpush2.msra.mxu0 0.0
  %592 = vmatprep.subr.mxu0 0.0
  %593 = vmatpush2.msra.mxu0 0.0
  %594 = vmatprep.subr.mxu0 0.0
  %595 = vmatpush2.msra.mxu0 0.0
  %596 = vmatprep.subr.mxu0 0.0
  %597 = vmatpush2.msra.mxu0 0.0
  %598 = vmatprep.subr.mxu0 0.0
  %599 = vmatpush2.msra.mxu0 0.0
  %600 = vmatprep.mubr.f32.mxu0 0.0
  %601 = vmatmul.mubr.f32.gmra.mxu0 %v29
  %v602 = vpop.f32.mrf.mxu0
  %v603 = vadd.f32 0.0, %v602
  %v604 = vpop.f32.mrf.mxu0
  %v605 = vadd.f32 0.0, %v604
  %606 = vdwg.mxu0
  %607 = vmatprep.subr.mxu0 0.0
  %608 = vmatpush1.msra.mxu0 0.0
  %609 = vmatprep.subr.mxu0 0.0
  %610 = vmatpush1.msra.mxu0 0.0
  %611 = vmatprep.subr.mxu0 0.0
  %612 = vmatpush1.msra.mxu0 0.0
  %613 = vmatprep.subr.mxu0 0.0
  %614 = vmatpush1.msra.mxu0 0.0
  %615 = vmatprep.subr.mxu0 0.0
  %616 = vmatpush1.msra.mxu0 0.0
  %617 = vmatprep.subr.mxu0 0.0
  %618 = vmatpush1.msra.mxu0 0.0
  %619 = vmatprep.subr.mxu0 0.0
  %620 = vmatpush1.msra.mxu0 0.0
  %621 = vmatprep.subr.mxu0 0.0
  %622 = vmatpush1.msra.mxu0 0.0
  %623 = vmatprep.subr.mxu0 0.0
  %624 = vmatpush1.msra.mxu0 0.0
  %625 = vmatprep.subr.mxu0 0.0
  %626 = vmatpush1.msra.mxu0 0.0
  %627 = vmatprep.subr.mxu0 0.0
  %628 = vmatpush1.msra.mxu0 0.0
  %629 = vmatprep.subr.mxu0 0.0
  %630 = vmatpush1.msra.mxu0 0.0
  %631 = vmatprep.subr.mxu0 0.0
  %632 = vmatpush1.msra.mxu0 %v534
  %633 = vmatprep.subr.mxu0 0.0
  %634 = vmatpush1.msra.mxu0 %v523
  %635 = vmatprep.subr.mxu0 0.0
  %636 = vmatpush1.msra.mxu0 %v520
  %637 = vmatprep.subr.mxu0 0.0
  %638 = vmatpush1.msra.mxu0 %v517
  %639 = vmatprep.subr.mxu0 0.0
  %640 = vmatpush2.msra.mxu0 0.0
  %641 = vmatprep.subr.mxu0 0.0
  %642 = vmatpush2.msra.mxu0 0.0
  %643 = vmatprep.subr.mxu0 0.0
  %644 = vmatpush2.msra.mxu0 0.0
  %645 = vmatprep.subr.mxu0 0.0
  %646 = vmatpush2.msra.mxu0 0.0
  %647 = vmatprep.subr.mxu0 0.0
  %648 = vmatpush2.msra.mxu0 0.0
  %649 = vmatprep.subr.mxu0 0.0
  %650 = vmatpush2.msra.mxu0 0.0
  %651 = vmatprep.subr.mxu0 0.0
  %652 = vmatpush2.msra.mxu0 0.0
  %653 = vmatprep.subr.mxu0 0.0
  %654 = vmatpush2.msra.mxu0 0.0
  %655 = vmatprep.subr.mxu0 0.0
  %656 = vmatpush2.msra.mxu0 0.0
  %657 = vmatprep.subr.mxu0 0.0
  %658 = vmatpush2.msra.mxu0 0.0
  %659 = vmatprep.subr.mxu0 0.0
  %660 = vmatpush2.msra.mxu0 0.0
  %661 = vmatprep.subr.mxu0 0.0
  %662 = vmatpush2.msra.mxu0 0.0
  %663 = vmatprep.subr.mxu0 0.0
  %664 = vmatpush2.msra.mxu0 0.0
  %665 = vmatprep.subr.mxu0 0.0
  %666 = vmatpush2.msra.mxu0 0.0
  %667 = vmatprep.subr.mxu0 0.0
  %668 = vmatpush2.msra.mxu0 0.0
  %669 = vmatprep.subr.mxu0 0.0
  %670 = vmatpush2.msra.mxu0 0.0
  %671 = vmatprep.mubr.f32.mxu0 0.0
  %672 = vmatmul.mubr.f32.gmra.mxu0 %v29
  %v673 = vpop.f32.mrf.mxu0
  %v674 = vadd.f32 0.0, %v673
  %v675 = vpop.f32.mrf.mxu0
  %676 = vdwg.mxu0
  %v677 = vmax.f32 %v511, %v603
  %v678 = vmax.f32 %v512, %v605
  %v679 = vmax.f32 %v513, %v674
  %v680 = vld [vmem:[%s2] sm:$0x3f]
  %682 = vset.pattern.permute.xlu0 0
  %683 = vperm.xlu0 %682, %v680
  %v684 = vpop.permute.xlu0 %683
  %v686 = vadd.f32 %v677, %v684
  %v687 = vadd.f32 %v678, %v684
  %v688 = vadd.f32 %v679, %v684
  %v689 = vmax.f32 %v686, 0.0
  %v690 = vmax.f32 %v687, 0.0
  %v691 = vmax.f32 %v688, 0.0
  %692 = vst [vmem:[%s3] sm:$0x3f] %v689
  %693 = vst [vmem:[%s3 + $0x8] sm:$0x3f] %v690
  %vm694 = vcmask 259072
  %695 = vst.msk [vmem:[%s3 + $0x10] sm:$0x3f] %vm694, %v691
  // Predicated region
  $region14: #{lenet_forward.2} parent=0 // pred_check
    _
  $region15: #{lenet_forward.2} parent=0 // pred_check_branch
    %697 = sbr.rel (0) target = $region17
  $region16: #{lenet_forward.2} parent=0 // pred_region
    _
  $region17: #{lenet_forward.2} parent=0 // pred_fallthru
    _
  // Predicated region
  $region18: #{lenet_forward.2} parent=0 // pred_check
    _
  $region19: #{lenet_forward.2} parent=0 // pred_check_branch
    %699 = sbr.rel (0) target = $region21
  $region20: #{lenet_forward.2} parent=0 // pred_region
    _
  $region21: #{lenet_forward.2} parent=0 // pred_fallthru
    _

// kernel: lenet_forward.3
$region0: #{lenet_forward.3}
  #allocation0 [shape = 'u32[]', space=smem, size = 0x4, offset = 0x4, fixed_abs, tag = 'smem constant byte address 0x4 - core index']
  #allocation1 [shape = 'u32[144,128]{1,0:T(1,128)}', space=vmem, size = 0x12000, scoped, tag = 'internal scratch']
  %s0 = inlined_call_operand.vmem [shape: f32[4,150,32], index: 0, kind: input, shape index: {}]
  %s1 = inlined_call_operand.vmem [shape: f32[16,150], index: 1, kind: input, shape index: {}]
  %s2 = inlined_call_operand.vmem [shape: f32[16,1], index: 2, kind: input, shape index: {}]
  %s3 = inlined_call_operand.vmem [shape: f32[10,16,16], index: 3, kind: input, shape index: {}]
  %s4 = inlined_call_operand.vmem [shape: f32[1,10], index: 4, kind: input, shape index: {}]
  %s5 = inlined_call_operand.hbm [shape: f32[2,10], index: 5, kind: output, shape index: {}]
  %s6 = sld [smem:[#allocation0]]
  $region30: #{lenet_forward.3} parent=0
    _
  %s8 = ssub.s32 1, %s6
  %s9 = scalar_select 0, %s8, %s6
  $region1: #{lenet_forward.3} parent=0
    #allocation2 [shape = 'u8[1024]{0}', space=vmem, size = 0x400, scoped, tag = 'output window, operand 0, single buffered']
    #allocation3 [shape = 's32[1]{0}', space=sflag, size = 0x4, scoped, tag = 'scoped memory for lenet_forward.3']
    %10 = vsyncpa [#allocation3], 0
    // Predicated region
    $region2: #{lenet_forward.3} parent=1 // pred_check
      _
    $region3: #{lenet_forward.3} parent=1 // pred_check_branch
      %12 = sbr.rel (0) target = $region5
    $region4: #{lenet_forward.3} parent=1 // pred_region
      _
    $region5: #{lenet_forward.3} parent=1 // pred_fallthru
      _
    // Predicated region
    $region6: #{lenet_forward.3} parent=1 // pred_check
      _
    $region7: #{lenet_forward.3} parent=1 // pred_check_branch
      %14 = sbr.rel (0) target = $region9
    $region8: #{lenet_forward.3} parent=1 // pred_region
      _
    $region9: #{lenet_forward.3} parent=1 // pred_fallthru
      _
    // Predicated region
    $region10: #{lenet_forward.3} parent=1 // pred_check
      _
    $region11: #{lenet_forward.3} parent=1 // pred_check_branch
      %16 = sbr.rel (0) target = $region13
    $region12: #{lenet_forward.3} parent=1 // pred_region
      _
    $region13: #{lenet_forward.3} parent=1 // pred_fallthru
      _
    // Predicated region
    $region14: #{lenet_forward.3} parent=1 // pred_check
      _
    $region15: #{lenet_forward.3} parent=1 // pred_check_branch
      %18 = sbr.rel (0) target = $region17
    $region16: #{lenet_forward.3} parent=1 // pred_region
      _
    $region17: #{lenet_forward.3} parent=1 // pred_fallthru
      _
    // Predicated region
    $region18: #{lenet_forward.3} parent=1 // pred_check
      _
    $region19: #{lenet_forward.3} parent=1 // pred_check_branch
      %20 = sbr.rel (0) target = $region21
    $region20: #{lenet_forward.3} parent=1 // pred_region
      _
    $region21: #{lenet_forward.3} parent=1 // pred_fallthru
      _
    %v21 = vld [vmem:[%s1] sm:$0xff]
    %v22 = vld [vmem:[%s1 + $0x8] sm:$0xff]
    %v23 = vld [vmem:[%s1 + $0x10] sm:$0xff]
    %v24 = vld [vmem:[%s1 + $0x18] sm:$0xff]
    %v25 = vld [vmem:[%s0] sm:$0xff]
    %v26 = vld [vmem:[%s0 + $0x8] sm:$0xff]
    %v27 = vld [vmem:[%s0 + $0x10] sm:$0xff]
    %v28 = vld [vmem:[%s0 + $0x18] sm:$0xff]
    %v29 = vld [vmem:[%s0 + $0x20] sm:$0xff]
    %v30 = vld [vmem:[%s0 + $0x28] sm:$0xff]
    %v31 = vld [vmem:[%s0 + $0x30] sm:$0xff]
    %v32 = vld [vmem:[%s0 + $0x38] sm:$0xff]
    %v33 = vld [vmem:[%s0 + $0x40] sm:$0xff]
    %v34 = vld [vmem:[%s0 + $0x48] sm:$0xff]
    %v35 = vld [vmem:[%s0 + $0x50] sm:$0xff]
    %v36 = vld [vmem:[%s0 + $0x58] sm:$0xff]
    %v37 = vld [vmem:[%s0 + $0x60] sm:$0xff]
    %v38 = vld [vmem:[%s0 + $0x68] sm:$0xff]
    %v39 = vld [vmem:[%s0 + $0x70] sm:$0xff]
    %v40 = vld [vmem:[%s0 + $0x78] sm:$0xff]
    %v41 = vld [vmem:[%s0 + $0x80] sm:$0xff]
    %v42 = vld [vmem:[%s0 + $0x88] sm:$0xff]
    %v43 = vld [vmem:[%s0 + $0x90] sm:$0x3f]
    %vm44 = vcmask 179200
    %v46 = vsel %vm44, %v22, 0
    %v49 = vsel %vm44, %v24, 0
    %vm51 = vcmask 1045504
    %v53 = vsel %vm51, %v43, 0
    %55 = vmatprep.subr.mxu0 0.0
    %56 = vmatpush1.msra.mxu0 %v40
    %57 = vmatprep.subr.mxu0 0.0
    %58 = vmatpush1.msra.mxu0 %v39
    %59 = vmatprep.subr.mxu0 0.0
    %60 = vmatpush1.msra.mxu0 %v38
    %61 = vmatprep.subr.mxu0 0.0
    %62 = vmatpush1.msra.mxu0 %v37
    %63 = vmatprep.subr.mxu0 0.0
    %64 = vmatpush1.msra.mxu0 %v36
    %65 = vmatprep.subr.mxu0 0.0
    %66 = vmatpush1.msra.mxu0 %v35
    %67 = vmatprep.subr.mxu0 0.0
    %68 = vmatpush1.msra.mxu0 %v34
    %69 = vmatprep.subr.mxu0 0.0
    %70 = vmatpush1.msra.mxu0 %v33
    %71 = vmatprep.subr.mxu0 0.0
    %72 = vmatpush1.msra.mxu0 %v32
    %73 = vmatprep.subr.mxu0 0.0
    %74 = vmatpush1.msra.mxu0 %v31
    %75 = vmatprep.subr.mxu0 0.0
    %76 = vmatpush1.msra.mxu0 %v30
    %77 = vmatprep.subr.mxu0 0.0
    %78 = vmatpush1.msra.mxu0 %v29
    %79 = vmatprep.subr.mxu0 0.0
    %80 = vmatpush1.msra.mxu0 %v28
    %81 = vmatprep.subr.mxu0 0.0
    %82 = vmatpush1.msra.mxu0 %v27
    %83 = vmatprep.subr.mxu0 0.0
    %84 = vmatpush1.msra.mxu0 %v26
    %85 = vmatprep.subr.mxu0 0.0
    %86 = vmatpush1.msra.mxu0 %v25
    %87 = vmatprep.subr.mxu0 0.0
    %88 = vmatpush2.msra.mxu0 0.0
    %89 = vmatprep.subr.mxu0 0.0
    %90 = vmatpush2.msra.mxu0 0.0
    %91 = vmatprep.subr.mxu0 0.0
    %92 = vmatpush2.msra.mxu0 0.0
    %93 = vmatprep.subr.mxu0 0.0
    %94 = vmatpush2.msra.mxu0 0.0
    %95 = vmatprep.subr.mxu0 0.0
    %96 = vmatpush2.msra.mxu0 0.0
    %97 = vmatprep.subr.mxu0 0.0
    %98 = vmatpush2.msra.mxu0 0.0
    %99 = vmatprep.subr.mxu0 0.0
    %100 = vmatpush2.msra.mxu0 0.0
    %101 = vmatprep.subr.mxu0 0.0
    %102 = vmatpush2.msra.mxu0 0.0
    %103 = vmatprep.subr.mxu0 0.0
    %104 = vmatpush2.msra.mxu0 0.0
    %105 = vmatprep.subr.mxu0 0.0
    %106 = vmatpush2.msra.mxu0 0.0
    %107 = vmatprep.subr.mxu0 0.0
    %108 = vmatpush2.msra.mxu0 0.0
    %109 = vmatprep.subr.mxu0 0.0
    %110 = vmatpush2.msra.mxu0 0.0
    %111 = vmatprep.subr.mxu0 0.0
    %112 = vmatpush2.msra.mxu0 0.0
    %113 = vmatprep.subr.mxu0 0.0
    %114 = vmatpush2.msra.mxu0 %v53
    %115 = vmatprep.subr.mxu0 0.0
    %116 = vmatpush2.msra.mxu0 %v42
    %117 = vmatprep.subr.mxu0 0.0
    %118 = vmatpush2.msra.mxu0 %v41
    %119 = vmatprep.mubr.f32.mxu0 %v46
    %120 = vmatmul.mubr.f32.gmra.mxu0 %v21
    %v121 = vpop.f32.mrf.mxu0
    %v122 = vadd.f32 0.0, %v121
    %v123 = vpop.f32.mrf.mxu0
    %124 = vmatprep.mubr.f32.mxu0 %v49
    %125 = vmatmul.mubr.f32.gmra.mxu0 %v23
    %v126 = vpop.f32.mrf.mxu0
    %v127 = vadd.f32 0.0, %v126
    %v128 = vpop.f32.mrf.mxu0
    %129 = vdwg.mxu0
    %s130 = scalar_lea.vmem %s0, 152
    %v131 = vld [vmem:[%s130] sm:$0xff]
    %v132 = vld [vmem:[%s130 + $0x8] sm:$0xff]
    %v133 = vld [vmem:[%s130 + $0x10] sm:$0xff]
    %v134 = vld [vmem:[%s130 + $0x18] sm:$0xff]
    %v135 = vld [vmem:[%s130 + $0x20] sm:$0xff]
    %v136 = vld [vmem:[%s130 + $0x28] sm:$0xff]
    %v137 = vld [vmem:[%s130 + $0x30] sm:$0xff]
    %v138 = vld [vmem:[%s130 + $0x38] sm:$0xff]
    %v139 = vld [vmem:[%s130 + $0x40] sm:$0xff]
    %v140 = vld [vmem:[%s130 + $0x48] sm:$0xff]
    %v141 = vld [vmem:[%s130 + $0x50] sm:$0xff]
    %v142 = vld [vmem:[%s130 + $0x58] sm:$0xff]
    %v143 = vld [vmem:[%s130 + $0x60] sm:$0xff]
    %v144 = vld [vmem:[%s130 + $0x68] sm:$0xff]
    %v145 = vld [vmem:[%s130 + $0x70] sm:$0xff]
    %v146 = vld [vmem:[%s130 + $0x78] sm:$0xff]
    %v147 = vld [vmem:[%s130 + $0x80] sm:$0xff]
    %v148 = vld [vmem:[%s130 + $0x88] sm:$0xff]
    %v149 = vld [vmem:[%s130 + $0x90] sm:$0x3f]
    %v151 = vsel %vm51, %v149, 0
    %153 = vmatprep.subr.mxu0 0.0
    %154 = vmatpush1.msra.mxu0 %v146
    %155 = vmatprep.subr.mxu0 0.0
    %156 = vmatpush1.msra.mxu0 %v145
    %157 = vmatprep.subr.mxu0 0.0
    %158 = vmatpush1.msra.mxu0 %v144
    %159 = vmatprep.subr.mxu0 0.0
    %160 = vmatpush1.msra.mxu0 %v143
    %161 = vmatprep.subr.mxu0 0.0
    %162 = vmatpush1.msra.mxu0 %v142
    %163 = vmatprep.subr.mxu0 0.0
    %164 = vmatpush1.msra.mxu0 %v141
    %165 = vmatprep.subr.mxu0 0.0
    %166 = vmatpush1.msra.mxu0 %v140
    %167 = vmatprep.subr.mxu0 0.0
    %168 = vmatpush1.msra.mxu0 %v139
    %169 = vmatprep.subr.mxu0 0.0
    %170 = vmatpush1.msra.mxu0 %v138
    %171 = vmatprep.subr.mxu0 0.0
    %172 = vmatpush1.msra.mxu0 %v137
    %173 = vmatprep.subr.mxu0 0.0
    %174 = vmatpush1.msra.mxu0 %v136
    %175 = vmatprep.subr.mxu0 0.0
    %176 = vmatpush1.msra.mxu0 %v135
    %177 = vmatprep.subr.mxu0 0.0
    %178 = vmatpush1.msra.mxu0 %v134
    %179 = vmatprep.subr.mxu0 0.0
    %180 = vmatpush1.msra.mxu0 %v133
    %181 = vmatprep.subr.mxu0 0.0
    %182 = vmatpush1.msra.mxu0 %v132
    %183 = vmatprep.subr.mxu0 0.0
    %184 = vmatpush1.msra.mxu0 %v131
    %185 = vmatprep.subr.mxu0 0.0
    %186 = vmatpush2.msra.mxu0 0.0
    %187 = vmatprep.subr.mxu0 0.0
    %188 = vmatpush2.msra.mxu0 0.0
    %189 = vmatprep.subr.mxu0 0.0
    %190 = vmatpush2.msra.mxu0 0.0
    %191 = vmatprep.subr.mxu0 0.0
    %192 = vmatpush2.msra.mxu0 0.0
    %193 = vmatprep.subr.mxu0 0.0
    %194 = vmatpush2.msra.mxu0 0.0
    %195 = vmatprep.subr.mxu0 0.0
    %196 = vmatpush2.msra.mxu0 0.0
    %197 = vmatprep.subr.mxu0 0.0
    %198 = vmatpush2.msra.mxu0 0.0
    %199 = vmatprep.subr.mxu0 0.0
    %200 = vmatpush2.msra.mxu0 0.0
    %201 = vmatprep.subr.mxu0 0.0
    %202 = vmatpush2.msra.mxu0 0.0
    %203 = vmatprep.subr.mxu0 0.0
    %204 = vmatpush2.msra.mxu0 0.0
    %205 = vmatprep.subr.mxu0 0.0
    %206 = vmatpush2.msra.mxu0 0.0
    %207 = vmatprep.subr.mxu0 0.0
    %208 = vmatpush2.msra.mxu0 0.0
    %209 = vmatprep.subr.mxu0 0.0
    %210 = vmatpush2.msra.mxu0 0.0
    %211 = vmatprep.subr.mxu0 0.0
    %212 = vmatpush2.msra.mxu0 %v151
    %213 = vmatprep.subr.mxu0 0.0
    %214 = vmatpush2.msra.mxu0 %v148
    %215 = vmatprep.subr.mxu0 0.0
    %216 = vmatpush2.msra.mxu0 %v147
    %217 = vmatprep.mubr.f32.mxu0 %v46
    %218 = vmatmul.mubr.f32.gmra.mxu0 %v21
    %v219 = vpop.f32.mrf.mxu0
    %v220 = vadd.f32 0.0, %v219
    %v221 = vpop.f32.mrf.mxu0
    %222 = vmatprep.mubr.f32.mxu0 %v49
    %223 = vmatmul.mubr.f32.gmra.mxu0 %v23
    %v224 = vpop.f32.mrf.mxu0
    %v225 = vadd.f32 0.0, %v224
    %v226 = vpop.f32.mrf.mxu0
    %227 = vdwg.mxu0
    %v228 = vmax.f32 %v122, %v220
    %v229 = vmax.f32 %v127, %v225
    %s230 = scalar_lea.vmem %s0, 304
    %v231 = vld [vmem:[%s230] sm:$0xff]
    %v232 = vld [vmem:[%s230 + $0x8] sm:$0xff]
    %v233 = vld [vmem:[%s230 + $0x10] sm:$0xff]
    %v234 = vld [vmem:[%s230 + $0x18] sm:$0xff]
    %v235 = vld [vmem:[%s230 + $0x20] sm:$0xff]
    %v236 = vld [vmem:[%s230 + $0x28] sm:$0xff]
    %v237 = vld [vmem:[%s230 + $0x30] sm:$0xff]
    %v238 = vld [vmem:[%s230 + $0x38] sm:$0xff]
    %v239 = vld [vmem:[%s230 + $0x40] sm:$0xff]
    %v240 = vld [vmem:[%s230 + $0x48] sm:$0xff]
    %v241 = vld [vmem:[%s230 + $0x50] sm:$0xff]
    %v242 = vld [vmem:[%s230 + $0x58] sm:$0xff]
    %v243 = vld [vmem:[%s230 + $0x60] sm:$0xff]
    %v244 = vld [vmem:[%s230 + $0x68] sm:$0xff]
    %v245 = vld [vmem:[%s230 + $0x70] sm:$0xff]
    %v246 = vld [vmem:[%s230 + $0x78] sm:$0xff]
    %v247 = vld [vmem:[%s230 + $0x80] sm:$0xff]
    %v248 = vld [vmem:[%s230 + $0x88] sm:$0xff]
    %v249 = vld [vmem:[%s230 + $0x90] sm:$0x3f]
    %v251 = vsel %vm51, %v249, 0
    %253 = vmatprep.subr.mxu0 0.0
    %254 = vmatpush1.msra.mxu0 %v246
    %255 = vmatprep.subr.mxu0 0.0
    %256 = vmatpush1.msra.mxu0 %v245
    %257 = vmatprep.subr.mxu0 0.0
    %258 = vmatpush1.msra.mxu0 %v244
    %259 = vmatprep.subr.mxu0 0.0
    %260 = vmatpush1.msra.mxu0 %v243
    %261 = vmatprep.subr.mxu0 0.0
    %262 = vmatpush1.msra.mxu0 %v242
    %263 = vmatprep.subr.mxu0 0.0
    %264 = vmatpush1.msra.mxu0 %v241
    %265 = vmatprep.subr.mxu0 0.0
    %266 = vmatpush1.msra.mxu0 %v240
    %267 = vmatprep.subr.mxu0 0.0
    %268 = vmatpush1.msra.mxu0 %v239
    %269 = vmatprep.subr.mxu0 0.0
    %270 = vmatpush1.msra.mxu0 %v238
    %271 = vmatprep.subr.mxu0 0.0
    %272 = vmatpush1.msra.mxu0 %v237
    %273 = vmatprep.subr.mxu0 0.0
    %274 = vmatpush1.msra.mxu0 %v236
    %275 = vmatprep.subr.mxu0 0.0
    %276 = vmatpush1.msra.mxu0 %v235
    %277 = vmatprep.subr.mxu0 0.0
    %278 = vmatpush1.msra.mxu0 %v234
    %279 = vmatprep.subr.mxu0 0.0
    %280 = vmatpush1.msra.mxu0 %v233
    %281 = vmatprep.subr.mxu0 0.0
    %282 = vmatpush1.msra.mxu0 %v232
    %283 = vmatprep.subr.mxu0 0.0
    %284 = vmatpush1.msra.mxu0 %v231
    %285 = vmatprep.subr.mxu0 0.0
    %286 = vmatpush2.msra.mxu0 0.0
    %287 = vmatprep.subr.mxu0 0.0
    %288 = vmatpush2.msra.mxu0 0.0
    %289 = vmatprep.subr.mxu0 0.0
    %290 = vmatpush2.msra.mxu0 0.0
    %291 = vmatprep.subr.mxu0 0.0
    %292 = vmatpush2.msra.mxu0 0.0
    %293 = vmatprep.subr.mxu0 0.0
    %294 = vmatpush2.msra.mxu0 0.0
    %295 = vmatprep.subr.mxu0 0.0
    %296 = vmatpush2.msra.mxu0 0.0
    %297 = vmatprep.subr.mxu0 0.0
    %298 = vmatpush2.msra.mxu0 0.0
    %299 = vmatprep.subr.mxu0 0.0
    %300 = vmatpush2.msra.mxu0 0.0
    %301 = vmatprep.subr.mxu0 0.0
    %302 = vmatpush2.msra.mxu0 0.0
    %303 = vmatprep.subr.mxu0 0.0
    %304 = vmatpush2.msra.mxu0 0.0
    %305 = vmatprep.subr.mxu0 0.0
    %306 = vmatpush2.msra.mxu0 0.0
    %307 = vmatprep.subr.mxu0 0.0
    %308 = vmatpush2.msra.mxu0 0.0
    %309 = vmatprep.subr.mxu0 0.0
    %310 = vmatpush2.msra.mxu0 0.0
    %311 = vmatprep.subr.mxu0 0.0
    %312 = vmatpush2.msra.mxu0 %v251
    %313 = vmatprep.subr.mxu0 0.0
    %314 = vmatpush2.msra.mxu0 %v248
    %315 = vmatprep.subr.mxu0 0.0
    %316 = vmatpush2.msra.mxu0 %v247
    %317 = vmatprep.mubr.f32.mxu0 %v46
    %318 = vmatmul.mubr.f32.gmra.mxu0 %v21
    %v319 = vpop.f32.mrf.mxu0
    %v320 = vadd.f32 0.0, %v319
    %v321 = vpop.f32.mrf.mxu0
    %322 = vmatprep.mubr.f32.mxu0 %v49
    %323 = vmatmul.mubr.f32.gmra.mxu0 %v23
    %v324 = vpop.f32.mrf.mxu0
    %v325 = vadd.f32 0.0, %v324
    %v326 = vpop.f32.mrf.mxu0
    %327 = vdwg.mxu0
    %v328 = vmax.f32 %v228, %v320
    %v329 = vmax.f32 %v229, %v325
    %s330 = scalar_lea.vmem %s0, 456
    %v331 = vld [vmem:[%s330] sm:$0xff]
    %v332 = vld [vmem:[%s330 + $0x8] sm:$0xff]
    %v333 = vld [vmem:[%s330 + $0x10] sm:$0xff]
    %v334 = vld [vmem:[%s330 + $0x18] sm:$0xff]
    %v335 = vld [vmem:[%s330 + $0x20] sm:$0xff]
    %v336 = vld [vmem:[%s330 + $0x28] sm:$0xff]
    %v337 = vld [vmem:[%s330 + $0x30] sm:$0xff]
    %v338 = vld [vmem:[%s330 + $0x38] sm:$0xff]
    %v339 = vld [vmem:[%s330 + $0x40] sm:$0xff]
    %v340 = vld [vmem:[%s330 + $0x48] sm:$0xff]
    %v341 = vld [vmem:[%s330 + $0x50] sm:$0xff]
    %v342 = vld [vmem:[%s330 + $0x58] sm:$0xff]
    %v343 = vld [vmem:[%s330 + $0x60] sm:$0xff]
    %v344 = vld [vmem:[%s330 + $0x68] sm:$0xff]
    %v345 = vld [vmem:[%s330 + $0x70] sm:$0xff]
    %v346 = vld [vmem:[%s330 + $0x78] sm:$0xff]
    %v347 = vld [vmem:[%s330 + $0x80] sm:$0xff]
    %v348 = vld [vmem:[%s330 + $0x88] sm:$0xff]
    %v349 = vld [vmem:[%s330 + $0x90] sm:$0x3f]
    %v351 = vsel %vm51, %v349, 0
    %353 = vmatprep.subr.mxu0 0.0
    %354 = vmatpush1.msra.mxu0 %v346
    %355 = vmatprep.subr.mxu0 0.0
    %356 = vmatpush1.msra.mxu0 %v345
    %357 = vmatprep.subr.mxu0 0.0
    %358 = vmatpush1.msra.mxu0 %v344
    %359 = vmatprep.subr.mxu0 0.0
    %360 = vmatpush1.msra.mxu0 %v343
    %361 = vmatprep.subr.mxu0 0.0
    %362 = vmatpush1.msra.mxu0 %v342
    %363 = vmatprep.subr.mxu0 0.0
    %364 = vmatpush1.msra.mxu0 %v341
    %365 = vmatprep.subr.mxu0 0.0
    %366 = vmatpush1.msra.mxu0 %v340
    %367 = vmatprep.subr.mxu0 0.0
    %368 = vmatpush1.msra.mxu0 %v339
    %369 = vmatprep.subr.mxu0 0.0
    %370 = vmatpush1.msra.mxu0 %v338
    %371 = vmatprep.subr.mxu0 0.0
    %372 = vmatpush1.msra.mxu0 %v337
    %373 = vmatprep.subr.mxu0 0.0
    %374 = vmatpush1.msra.mxu0 %v336
    %375 = vmatprep.subr.mxu0 0.0
    %376 = vmatpush1.msra.mxu0 %v335
    %377 = vmatprep.subr.mxu0 0.0
    %378 = vmatpush1.msra.mxu0 %v334
    %379 = vmatprep.subr.mxu0 0.0
    %380 = vmatpush1.msra.mxu0 %v333
    %381 = vmatprep.subr.mxu0 0.0
    %382 = vmatpush1.msra.mxu0 %v332
    %383 = vmatprep.subr.mxu0 0.0
    %384 = vmatpush1.msra.mxu0 %v331
    %385 = vmatprep.subr.mxu0 0.0
    %386 = vmatpush2.msra.mxu0 0.0
    %387 = vmatprep.subr.mxu0 0.0
    %388 = vmatpush2.msra.mxu0 0.0
    %389 = vmatprep.subr.mxu0 0.0
    %390 = vmatpush2.msra.mxu0 0.0
    %391 = vmatprep.subr.mxu0 0.0
    %392 = vmatpush2.msra.mxu0 0.0
    %393 = vmatprep.subr.mxu0 0.0
    %394 = vmatpush2.msra.mxu0 0.0
    %395 = vmatprep.subr.mxu0 0.0
    %396 = vmatpush2.msra.mxu0 0.0
    %397 = vmatprep.subr.mxu0 0.0
    %398 = vmatpush2.msra.mxu0 0.0
    %399 = vmatprep.subr.mxu0 0.0
    %400 = vmatpush2.msra.mxu0 0.0
    %401 = vmatprep.subr.mxu0 0.0
    %402 = vmatpush2.msra.mxu0 0.0
    %403 = vmatprep.subr.mxu0 0.0
    %404 = vmatpush2.msra.mxu0 0.0
    %405 = vmatprep.subr.mxu0 0.0
    %406 = vmatpush2.msra.mxu0 0.0
    %407 = vmatprep.subr.mxu0 0.0
    %408 = vmatpush2.msra.mxu0 0.0
    %409 = vmatprep.subr.mxu0 0.0
    %410 = vmatpush2.msra.mxu0 0.0
    %411 = vmatprep.subr.mxu0 0.0
    %412 = vmatpush2.msra.mxu0 %v351
    %413 = vmatprep.subr.mxu0 0.0
    %414 = vmatpush2.msra.mxu0 %v348
    %415 = vmatprep.subr.mxu0 0.0
    %416 = vmatpush2.msra.mxu0 %v347
    %417 = vmatprep.mubr.f32.mxu0 %v46
    %418 = vmatmul.mubr.f32.gmra.mxu0 %v21
    %v419 = vpop.f32.mrf.mxu0
    %v420 = vadd.f32 0.0, %v419
    %v421 = vpop.f32.mrf.mxu0
    %422 = vmatprep.mubr.f32.mxu0 %v49
    %423 = vmatmul.mubr.f32.gmra.mxu0 %v23
    %v424 = vpop.f32.mrf.mxu0
    %v425 = vadd.f32 0.0, %v424
    %v426 = vpop.f32.mrf.mxu0
    %427 = vdwg.mxu0
    %v428 = vmax.f32 %v328, %v420
    %v429 = vmax.f32 %v329, %v425
    %v430 = vld [vmem:[%s2] sm:$0xff]
    %v431 = vld [vmem:[%s2 + $0x8] sm:$0xff]
    %433 = vset.pattern.permute.xlu0 0
    %434 = vperm.xlu0 %433, %v430
    %v435 = vpop.permute.xlu0 %434
    %438 = vset.pattern.permute.xlu0 0
    %439 = vperm.xlu0 %438, %v431
    %v440 = vpop.permute.xlu0 %439
    %v442 = vadd.f32 %v428, %v435
    %v443 = vadd.f32 %v429, %v440
    %v444 = vmax.f32 %v442, 0.0
    %v445 = vmax.f32 %v443, 0.0
    %v446 = vld [vmem:[%s3] sm:$0xff]
    %v447 = vld [vmem:[%s3 + $0x8] sm:$0xff]
    %v448 = vld [vmem:[%s3 + $0x10] sm:$0xff]
    %v449 = vld [vmem:[%s3 + $0x18] sm:$0xff]
    %v450 = vld [vmem:[%s3 + $0x20] sm:$0xff]
    %v451 = vld [vmem:[%s3 + $0x28] sm:$0xff]
    %v452 = vld [vmem:[%s3 + $0x30] sm:$0xff]
    %v453 = vld [vmem:[%s3 + $0x38] sm:$0xff]
    %v454 = vld [vmem:[%s3 + $0x40] sm:$0xff]
    %v455 = vld [vmem:[%s3 + $0x48] sm:$0xff]
    %v456 = vld [vmem:[%s3 + $0x50] sm:$0xff]
    %v457 = vld [vmem:[%s3 + $0x58] sm:$0xff]
    %v458 = vld [vmem:[%s3 + $0x60] sm:$0xff]
    %v459 = vld [vmem:[%s3 + $0x68] sm:$0xff]
    %v460 = vld [vmem:[%s3 + $0x70] sm:$0xff]
    %v461 = vld [vmem:[%s3 + $0x78] sm:$0xff]
    %v462 = vld [vmem:[%s3 + $0x80] sm:$0xff]
    %v463 = vld [vmem:[%s3 + $0x88] sm:$0xff]
    %v464 = vld [vmem:[%s3 + $0x90] sm:$0xff]
    %v465 = vld [vmem:[%s3 + $0x98] sm:$0xff]
    %v466 = vmul.f32 %v446, %v444
    %v467 = vmul.f32 %v447, %v445
    %v468 = vmul.f32 %v448, %v444
    %v469 = vmul.f32 %v449, %v445
    %v470 = vmul.f32 %v450, %v444
    %v471 = vmul.f32 %v451, %v445
    %v472 = vmul.f32 %v452, %v444
    %v473 = vmul.f32 %v453, %v445
    %v474 = vmul.f32 %v454, %v444
    %v475 = vmul.f32 %v455, %v445
    %v476 = vmul.f32 %v456, %v444
    %v477 = vmul.f32 %v457, %v445
    %v478 = vmul.f32 %v458, %v444
    %v479 = vmul.f32 %v459, %v445
    %v480 = vmul.f32 %v460, %v444
    %v481 = vmul.f32 %v461, %v445
    %v482 = vmul.f32 %v462, %v444
    %v483 = vmul.f32 %v463, %v445
    %v484 = vmul.f32 %v464, %v444
    %v485 = vmul.f32 %v465, %v445
    %vm486 = vcmask 130048
    %v487 = vsel %vm486, %v466, 0.0
    %488 = vadd.xlane.f32.xlu0 %v487
    %v489 = vpop.xlane.xlu0 %488
    %v490 = vsel %vm486, %v467, 0.0
    %491 = vadd.xlane.f32.xlu0 %v490
    %v492 = vpop.xlane.xlu0 %491
    %v493 = vsel %vm486, %v468, 0.0
    %494 = vadd.xlane.f32.xlu0 %v493
    %v495 = vpop.xlane.xlu0 %494
    %v496 = vsel %vm486, %v469, 0.0
    %497 = vadd.xlane.f32.xlu0 %v496
    %v498 = vpop.xlane.xlu0 %497
    %v499 = vsel %vm486, %v470, 0.0
    %500 = vadd.xlane.f32.xlu0 %v499
    %v501 = vpop.xlane.xlu0 %500
    %v502 = vsel %vm486, %v471, 0.0
    %503 = vadd.xlane.f32.xlu0 %v502
    %v504 = vpop.xlane.xlu0 %503
    %v505 = vsel %vm486, %v472, 0.0
    %506 = vadd.xlane.f32.xlu0 %v505
    %v507 = vpop.xlane.xlu0 %506
    %v508 = vsel %vm486, %v473, 0.0
    %509 = vadd.xlane.f32.xlu0 %v508
    %v510 = vpop.xlane.xlu0 %509
    %v511 = vsel %vm486, %v474, 0.0
    %512 = vadd.xlane.f32.xlu0 %v511
    %v513 = vpop.xlane.xlu0 %512
    %v514 = vsel %vm486, %v475, 0.0
    %515 = vadd.xlane.f32.xlu0 %v514
    %v516 = vpop.xlane.xlu0 %515
    %v517 = vsel %vm486, %v476, 0.0
    %518 = vadd.xlane.f32.xlu0 %v517
    %v519 = vpop.xlane.xlu0 %518
    %v520 = vsel %vm486, %v477, 0.0
    %521 = vadd.xlane.f32.xlu0 %v520
    %v522 = vpop.xlane.xlu0 %521
    %v523 = vsel %vm486, %v478, 0.0
    %524 = vadd.xlane.f32.xlu0 %v523
    %v525 = vpop.xlane.xlu0 %524
    %v526 = vsel %vm486, %v479, 0.0
    %527 = vadd.xlane.f32.xlu0 %v526
    %v528 = vpop.xlane.xlu0 %527
    %v529 = vsel %vm486, %v480, 0.0
    %530 = vadd.xlane.f32.xlu0 %v529
    %v531 = vpop.xlane.xlu0 %530
    %v532 = vsel %vm486, %v481, 0.0
    %533 = vadd.xlane.f32.xlu0 %v532
    %v534 = vpop.xlane.xlu0 %533
    %v535 = vsel %vm486, %v482, 0.0
    %536 = vadd.xlane.f32.xlu0 %v535
    %v537 = vpop.xlane.xlu0 %536
    %v538 = vsel %vm486, %v483, 0.0
    %539 = vadd.xlane.f32.xlu0 %v538
    %v540 = vpop.xlane.xlu0 %539
    %v541 = vsel %vm486, %v484, 0.0
    %542 = vadd.xlane.f32.xlu0 %v541
    %v543 = vpop.xlane.xlu0 %542
    %v544 = vsel %vm486, %v485, 0.0
    %545 = vadd.xlane.f32.xlu0 %v544
    %v546 = vpop.xlane.xlu0 %545
    %v567 = vlaneseq
    %v568 = vand.u32 %v567, 127
    %v569 = vlaneseq
    %v570 = vshrl.u32 %v569, 7
    %v571 = vsub.s32 %v568, %v570
    %v572 = vrot.slane %v489, %v571
    %v573 = vadd.s32 %v568, 4294967288
    %v574 = vlaneseq
    %v575 = vshrl.u32 %v574, 7
    %v576 = vsub.s32 %v573, %v575
    %v577 = vrot.slane %v492, %v576
    %vm578 = vcmask 130112
    %v579 = vsel %vm578, %v577, %v572
    %v580 = vlaneseq
    %v581 = vshrl.u32 %v580, 7
    %v582 = vsub.s32 %v568, %v581
    %v583 = vrot.slane %v495, %v582
    %v584 = vlaneseq
    %v585 = vshrl.u32 %v584, 7
    %v586 = vsub.s32 %v573, %v585
    %v587 = vrot.slane %v498, %v586
    %v588 = vsel %vm578, %v587, %v583
    %v589 = vlaneseq
    %v590 = vshrl.u32 %v589, 7
    %v591 = vsub.s32 %v568, %v590
    %v592 = vrot.slane %v501, %v591
    %v593 = vlaneseq
    %v594 = vshrl.u32 %v593, 7
    %v595 = vsub.s32 %v573, %v594
    %v596 = vrot.slane %v504, %v595
    %v597 = vsel %vm578, %v596, %v592
    %v598 = vlaneseq
    %v599 = vshrl.u32 %v598, 7
    %v600 = vsub.s32 %v568, %v599
    %v601 = vrot.slane %v507, %v600
    %v602 = vlaneseq
    %v603 = vshrl.u32 %v602, 7
    %v604 = vsub.s32 %v573, %v603
    %v605 = vrot.slane %v510, %v604
    %v606 = vsel %vm578, %v605, %v601
    %v607 = vlaneseq
    %v608 = vshrl.u32 %v607, 7
    %v609 = vsub.s32 %v568, %v608
    %v610 = vrot.slane %v513, %v609
    %v611 = vlaneseq
    %v612 = vshrl.u32 %v611, 7
    %v613 = vsub.s32 %v573, %v612
    %v614 = vrot.slane %v516, %v613
    %v615 = vsel %vm578, %v614, %v610
    %v616 = vlaneseq
    %v617 = vshrl.u32 %v616, 7
    %v618 = vsub.s32 %v568, %v617
    %v619 = vrot.slane %v519, %v618
    %v620 = vlaneseq
    %v621 = vshrl.u32 %v620, 7
    %v622 = vsub.s32 %v573, %v621
    %v623 = vrot.slane %v522, %v622
    %v624 = vsel %vm578, %v623, %v619
    %v625 = vlaneseq
    %v626 = vshrl.u32 %v625, 7
    %v627 = vsub.s32 %v568, %v626
    %v628 = vrot.slane %v525, %v627
    %v629 = vlaneseq
    %v630 = vshrl.u32 %v629, 7
    %v631 = vsub.s32 %v573, %v630
    %v632 = vrot.slane %v528, %v631
    %v633 = vsel %vm578, %v632, %v628
    %v634 = vlaneseq
    %v635 = vshrl.u32 %v634, 7
    %v636 = vsub.s32 %v568, %v635
    %v637 = vrot.slane %v531, %v636
    %v638 = vlaneseq
    %v639 = vshrl.u32 %v638, 7
    %v640 = vsub.s32 %v573, %v639
    %v641 = vrot.slane %v534, %v640
    %v642 = vsel %vm578, %v641, %v637
    %v643 = vlaneseq
    %v644 = vshrl.u32 %v643, 7
    %v645 = vsub.s32 %v568, %v644
    %v646 = vrot.slane %v537, %v645
    %v647 = vlaneseq
    %v648 = vshrl.u32 %v647, 7
    %v649 = vsub.s32 %v573, %v648
    %v650 = vrot.slane %v540, %v649
    %v651 = vsel %vm578, %v650, %v646
    %v652 = vlaneseq
    %v653 = vshrl.u32 %v652, 7
    %v654 = vsub.s32 %v568, %v653
    %v655 = vrot.slane %v543, %v654
    %v656 = vlaneseq
    %v657 = vshrl.u32 %v656, 7
    %v658 = vsub.s32 %v573, %v657
    %v659 = vrot.slane %v546, %v658
    %v660 = vsel %vm578, %v659, %v655
    %vm661 = vcmask 1041409
    %v662 = vsel %vm661, %v588, %v579
    %vm663 = vcmask 1042434
    %v664 = vsel %vm663, %v597, %v662
    %vm665 = vcmask 1043459
    %v666 = vsel %vm665, %v606, %v664
    %vm667 = vcmask 1044484
    %v668 = vsel %vm667, %v615, %v666
    %vm669 = vcmask 1045509
    %v670 = vsel %vm669, %v624, %v668
    %vm671 = vcmask 1046534
    %v672 = vsel %vm671, %v633, %v670
    %vm673 = vcmask 1047559
    %v674 = vsel %vm673, %v642, %v672
    %v675 = vsel %vm661, %v660, %v651
    %v678 = vsel %vm486, %v674, 0.0
    %679 = vadd.xlane.f32.xlu0 %v678
    %v680 = vpop.xlane.xlu0 %679
    %vm681 = vcmask 123904
    %v682 = vsel %vm681, %v675, 0.0
    %683 = vadd.xlane.f32.xlu0 %v682
    %v684 = vpop.xlane.xlu0 %683
    %687 = vrot.lane.b32.xlu0 %v444, 112
    %v688 = vpop.permute.xlu0 %687
    %689 = vrot.lane.b32.xlu0 %v445, 112
    %v690 = vpop.permute.xlu0 %689
    %v693 = vmul.f32 %v446, %v688
    %v694 = vmul.f32 %v447, %v690
    %v695 = vmul.f32 %v448, %v688
    %v696 = vmul.f32 %v449, %v690
    %v697 = vmul.f32 %v450, %v688
    %v698 = vmul.f32 %v451, %v690
    %v699 = vmul.f32 %v452, %v688
    %v700 = vmul.f32 %v453, %v690
    %v701 = vmul.f32 %v454, %v688
    %v702 = vmul.f32 %v455, %v690
    %v703 = vmul.f32 %v456, %v688
    %v704 = vmul.f32 %v457, %v690
    %v705 = vmul.f32 %v458, %v688
    %v706 = vmul.f32 %v459, %v690
    %v707 = vmul.f32 %v460, %v688
    %v708 = vmul.f32 %v461, %v690
    %v709 = vmul.f32 %v462, %v688
    %v710 = vmul.f32 %v463, %v690
    %v711 = vmul.f32 %v464, %v688
    %v712 = vmul.f32 %v465, %v690
    %v713 = vsel %vm486, %v693, 0.0
    %714 = vadd.xlane.f32.xlu0 %v713
    %v715 = vpop.xlane.xlu0 %714
    %v716 = vsel %vm486, %v694, 0.0
    %717 = vadd.xlane.f32.xlu0 %v716
    %v718 = vpop.xlane.xlu0 %717
    %v719 = vsel %vm486, %v695, 0.0
    %720 = vadd.xlane.f32.xlu0 %v719
    %v721 = vpop.xlane.xlu0 %720
    %v722 = vsel %vm486, %v696, 0.0
    %723 = vadd.xlane.f32.xlu0 %v722
    %v724 = vpop.xlane.xlu0 %723
    %v725 = vsel %vm486, %v697, 0.0
    %726 = vadd.xlane.f32.xlu0 %v725
    %v727 = vpop.xlane.xlu0 %726
    %v728 = vsel %vm486, %v698, 0.0
    %729 = vadd.xlane.f32.xlu0 %v728
    %v730 = vpop.xlane.xlu0 %729
    %v731 = vsel %vm486, %v699, 0.0
    %732 = vadd.xlane.f32.xlu0 %v731
    %v733 = vpop.xlane.xlu0 %732
    %v734 = vsel %vm486, %v700, 0.0
    %735 = vadd.xlane.f32.xlu0 %v734
    %v736 = vpop.xlane.xlu0 %735
    %v737 = vsel %vm486, %v701, 0.0
    %738 = vadd.xlane.f32.xlu0 %v737
    %v739 = vpop.xlane.xlu0 %738
    %v740 = vsel %vm486, %v702, 0.0
    %741 = vadd.xlane.f32.xlu0 %v740
    %v742 = vpop.xlane.xlu0 %741
    %v743 = vsel %vm486, %v703, 0.0
    %744 = vadd.xlane.f32.xlu0 %v743
    %v745 = vpop.xlane.xlu0 %744
    %v746 = vsel %vm486, %v704, 0.0
    %747 = vadd.xlane.f32.xlu0 %v746
    %v748 = vpop.xlane.xlu0 %747
    %v749 = vsel %vm486, %v705, 0.0
    %750 = vadd.xlane.f32.xlu0 %v749
    %v751 = vpop.xlane.xlu0 %750
    %v752 = vsel %vm486, %v706, 0.0
    %753 = vadd.xlane.f32.xlu0 %v752
    %v754 = vpop.xlane.xlu0 %753
    %v755 = vsel %vm486, %v707, 0.0
    %756 = vadd.xlane.f32.xlu0 %v755
    %v757 = vpop.xlane.xlu0 %756
    %v758 = vsel %vm486, %v708, 0.0
    %759 = vadd.xlane.f32.xlu0 %v758
    %v760 = vpop.xlane.xlu0 %759
    %v761 = vsel %vm486, %v709, 0.0
    %762 = vadd.xlane.f32.xlu0 %v761
    %v763 = vpop.xlane.xlu0 %762
    %v764 = vsel %vm486, %v710, 0.0
    %765 = vadd.xlane.f32.xlu0 %v764
    %v766 = vpop.xlane.xlu0 %765
    %v767 = vsel %vm486, %v711, 0.0
    %768 = vadd.xlane.f32.xlu0 %v767
    %v769 = vpop.xlane.xlu0 %768
    %v770 = vsel %vm486, %v712, 0.0
    %771 = vadd.xlane.f32.xlu0 %v770
    %v772 = vpop.xlane.xlu0 %771
    %v793 = vlaneseq
    %v794 = vshrl.u32 %v793, 7
    %v795 = vsub.s32 %v568, %v794
    %v796 = vrot.slane %v715, %v795
    %v797 = vlaneseq
    %v798 = vshrl.u32 %v797, 7
    %v799 = vsub.s32 %v573, %v798
    %v800 = vrot.slane %v718, %v799
    %v801 = vsel %vm578, %v800, %v796
    %v802 = vlaneseq
    %v803 = vshrl.u32 %v802, 7
    %v804 = vsub.s32 %v568, %v803
    %v805 = vrot.slane %v721, %v804
    %v806 = vlaneseq
    %v807 = vshrl.u32 %v806, 7
    %v808 = vsub.s32 %v573, %v807
    %v809 = vrot.slane %v724, %v808
    %v810 = vsel %vm578, %v809, %v805
    %v811 = vlaneseq
    %v812 = vshrl.u32 %v811, 7
    %v813 = vsub.s32 %v568, %v812
    %v814 = vrot.slane %v727, %v813
    %v815 = vlaneseq
    %v816 = vshrl.u32 %v815, 7
    %v817 = vsub.s32 %v573, %v816
    %v818 = vrot.slane %v730, %v817
    %v819 = vsel %vm578, %v818, %v814
    %v820 = vlaneseq
    %v821 = vshrl.u32 %v820, 7
    %v822 = vsub.s32 %v568, %v821
    %v823 = vrot.slane %v733, %v822
    %v824 = vlaneseq
    %v825 = vshrl.u32 %v824, 7
    %v826 = vsub.s32 %v573, %v825
    %v827 = vrot.slane %v736, %v826
    %v828 = vsel %vm578, %v827, %v823
    %v829 = vlaneseq
    %v830 = vshrl.u32 %v829, 7
    %v831 = vsub.s32 %v568, %v830
    %v832 = vrot.slane %v739, %v831
    %v833 = vlaneseq
    %v834 = vshrl.u32 %v833, 7
    %v835 = vsub.s32 %v573, %v834
    %v836 = vrot.slane %v742, %v835
    %v837 = vsel %vm578, %v836, %v832
    %v838 = vlaneseq
    %v839 = vshrl.u32 %v838, 7
    %v840 = vsub.s32 %v568, %v839
    %v841 = vrot.slane %v745, %v840
    %v842 = vlaneseq
    %v843 = vshrl.u32 %v842, 7
    %v844 = vsub.s32 %v573, %v843
    %v845 = vrot.slane %v748, %v844
    %v846 = vsel %vm578, %v845, %v841
    %v847 = vlaneseq
    %v848 = vshrl.u32 %v847, 7
    %v849 = vsub.s32 %v568, %v848
    %v850 = vrot.slane %v751, %v849
    %v851 = vlaneseq
    %v852 = vshrl.u32 %v851, 7
    %v853 = vsub.s32 %v573, %v852
    %v854 = vrot.slane %v754, %v853
    %v855 = vsel %vm578, %v854, %v850
    %v856 = vlaneseq
    %v857 = vshrl.u32 %v856, 7
    %v858 = vsub.s32 %v568, %v857
    %v859 = vrot.slane %v757, %v858
    %v860 = vlaneseq
    %v861 = vshrl.u32 %v860, 7
    %v862 = vsub.s32 %v573, %v861
    %v863 = vrot.slane %v760, %v862
    %v864 = vsel %vm578, %v863, %v859
    %v865 = vlaneseq
    %v866 = vshrl.u32 %v865, 7
    %v867 = vsub.s32 %v568, %v866
    %v868 = vrot.slane %v763, %v867
    %v869 = vlaneseq
    %v870 = vshrl.u32 %v869, 7
    %v871 = vsub.s32 %v573, %v870
    %v872 = vrot.slane %v766, %v871
    %v873 = vsel %vm578, %v872, %v868
    %v874 = vlaneseq
    %v875 = vshrl.u32 %v874, 7
    %v876 = vsub.s32 %v568, %v875
    %v877 = vrot.slane %v769, %v876
    %v878 = vlaneseq
    %v879 = vshrl.u32 %v878, 7
    %v880 = vsub.s32 %v573, %v879
    %v881 = vrot.slane %v772, %v880
    %v882 = vsel %vm578, %v881, %v877
    %v883 = vsel %vm661, %v810, %v801
    %v884 = vsel %vm663, %v819, %v883
    %v885 = vsel %vm665, %v828, %v884
    %v886 = vsel %vm667, %v837, %v885
    %v887 = vsel %vm669, %v846, %v886
    %v888 = vsel %vm671, %v855, %v887
    %v889 = vsel %vm673, %v864, %v888
    %v890 = vsel %vm661, %v882, %v873
    %v893 = vsel %vm486, %v889, 0.0
    %894 = vadd.xlane.f32.xlu0 %v893
    %v895 = vpop.xlane.xlu0 %894
    %v896 = vsel %vm681, %v890, 0.0
    %897 = vadd.xlane.f32.xlu0 %v896
    %v898 = vpop.xlane.xlu0 %897
    %v901 = vlaneseq
    %v902 = vshrl.u32 %v901, 7
    %v903 = vsub.s32 %v568, %v902
    %v904 = vrot.slane %v680, %v903
    %v905 = vlaneseq
    %v906 = vshrl.u32 %v905, 7
    %v907 = vsub.s32 %v573, %v906
    %v908 = vrot.slane %v684, %v907
    %v909 = vsel %vm578, %v908, %v904
    %v913 = vlaneseq
    %v914 = vshrl.u32 %v913, 7
    %v915 = vsub.s32 %v568, %v914
    %v916 = vrot.slane %v895, %v915
    %v917 = vlaneseq
    %v918 = vshrl.u32 %v917, 7
    %v919 = vsub.s32 %v573, %v918
    %v920 = vrot.slane %v898, %v919
    %v921 = vsel %vm578, %v920, %v916
    %vm923 = vcmask 1040384
    %v924 = vsel %vm923, %v909, %v921
    %v925 = vld [vmem:[%s4] sm:$0x1]
    %v927 = vlaneseq
    %v928 = vshrl.u32 %v927, 7
    %v929 = vsub.s32 0, %v928
    %v930 = vrot.slane %v925, %v929
    %v932 = vadd.f32 %v924, %v930
    %v933 = vxor.u32 %v932, 2147483648
    %v934 = vmul.f32 %v933, 1.442695
    %v935 = vpow.pop %v934
    %v936 = vadd.f32 %v935, 1.0
    %v937 = vrcp.pop %v936
    %v938 = vmul.f32 1.0, %v937
    %vm939 = vcmask 74752
    %940 = vst.msk [vmem:[#allocation2] sm:$0x3] %vm939, %v938
    // Predicated region
    $region22: #{lenet_forward.3} parent=1 // pred_check
      _
    $region23: #{lenet_forward.3} parent=1 // pred_check_branch
      %942 = sbr.rel (0) target = $region25
    $region24: #{lenet_forward.3} parent=1 // pred_region
      %s944 = ssub.s32 32, 32
      %945 = vsyncadd [#allocation3], %s944
      %s947 = sshll.u32 [#allocation2], 4
      %s948 = int_to_ptr.vmem [resolvable:$true] %s947
      %950 = dma.vmem_to_hbm [thread:$0]  %s948, 32, %s5, [#allocation3]
    $region25: #{lenet_forward.3} parent=1 // pred_fallthru
      _
    // Predicated region
    $region26: #{lenet_forward.3} parent=1 // pred_check
      _
    $region27: #{lenet_forward.3} parent=1 // pred_check_branch
      %952 = sbr.rel (0) target = $region29
    $region28: #{lenet_forward.3} parent=1 // pred_region
      %953 = dma.done [#allocation3], 32
    $region29: #{lenet_forward.3} parent=1 // pred_fallthru
      _
    %954 = vsyncpa [#allocation3], 1

</llo_original>
